<compile_context>
chip_gen: v7x
topology: tpu7x:2x2x1
jax: 0.10.0
libtpu: 0.0.40
codegen_flags: <defaults>
</compile_context>

<pallas_src>
import functools

import numpy as np
import jax
import jax.numpy as jnp
from jax import lax
from jax.experimental import pallas as pl
from jax.experimental.pallas import tpu as pltpu

EPS = 1e-5
_LANES = 128


# ----------------------------- layout helpers ------------------------------

def _round_up(x, m):
    return (x + m - 1) // m * m


def _frame(h, w):
    """Per-image padded-frame metadata.  Every image uses the same frame, so
    masks / samplers are shared across the batch grid and blocks are halo-free."""
    hp, wp = h + 2, w + 2
    l = hp * wp
    return {"h": h, "w": w, "hp": hp, "wp": wp, "l": l,
            "lp": _round_up(l, _LANES)}


def _interior_mask(fr):
    """(1, lp) f32 mask: 1 on real (non-border) pixels of one image frame."""
    msk = np.zeros((fr["hp"], fr["wp"]), np.float32)
    msk[1:fr["h"] + 1, 1:fr["w"] + 1] = 1.0
    out = np.zeros((1, fr["lp"]), np.float32)
    out[0, :fr["l"]] = msk.reshape(-1)
    return jnp.asarray(out)


def _downsample_matrix(fr_in, fr_out):
    """Per-image 0/1 sampler S (lp_in, lp_out): picks the stride-2 window
    centers (padded input position (2*ho+1, 2*wo+1)) into padded output
    position (ho+1, wo+1).  Border / tail rows & columns stay all-zero, so the
    sampler output is already interior-masked.  Stored bf16 (0/1 is exact)."""
    s = np.zeros((fr_in["lp"], fr_out["lp"]), np.float32)
    for ho in range(fr_out["h"]):
        for wo in range(fr_out["w"]):
            q = (2 * ho + 1) * fr_in["wp"] + (2 * wo + 1)
            p = (ho + 1) * fr_out["wp"] + (wo + 1)
            s[q, p] = 1.0
    return jnp.asarray(s, dtype=jnp.bfloat16)


def _pack_nchw(x_nchw, fr):
    """NCHW -> lane-dense (C, N*lp): zero spatial border, zero per-image tail."""
    n, c = x_nchw.shape[0], x_nchw.shape[1]
    x = jnp.transpose(x_nchw, (1, 0, 2, 3))                 # (C, N, H, W)
    x = jnp.pad(x, ((0, 0), (0, 0), (1, 1), (1, 1)))        # (C, N, Hp, Wp)
    x = x.reshape(c, n, fr["l"])
    x = jnp.pad(x, ((0, 0), (0, 0), (0, fr["lp"] - fr["l"])))
    return x.reshape(c, n * fr["lp"])


def _unpack_nchw(y, c, n, fr):
    """(C, N*lp) -> NCHW (drops padded border and per-image lane tail)."""
    y = y.reshape(c, n, fr["lp"])[:, :, :fr["l"]]
    y = y.reshape(c, n, fr["hp"], fr["wp"])[:, :, 1:fr["h"] + 1, 1:fr["w"] + 1]
    return jnp.transpose(y, (1, 0, 2, 3))


def _fold_conv_bn(w_oihw, gamma, beta, mean, var):
    """Fold inference BN into the conv weight.  Returns a bf16 (Cout, 9*Cin)
    weight (taps ordered (dy, dx, ci), matching the in-kernel roll/concat
    order) and an f32 (Cout, 1) shift."""
    scale = gamma / jnp.sqrt(var + EPS)
    shift = beta - mean * scale
    cout, cin = w_oihw.shape[0], w_oihw.shape[1]
    wk = jnp.transpose(w_oihw, (0, 2, 3, 1)).reshape(cout, 9 * cin)
    wk = (wk * scale[:, None]).astype(jnp.bfloat16)          # MXU operand in bf16
    return wk, shift.reshape(cout, 1).astype(jnp.float32)


# ------------------------------ fused kernel -------------------------------

def _make_stage_kernel(plan, frames, block_relu):
    """One kernel body for the entire Stage; runs once per batch-grid step."""
    n_blocks = len(plan)
    has_ds = plan[0]["increase"]

    def conv_taps(a, wp, lp):
        # In-kernel "im2col": 9 lane rotations of the zero-padded flattened
        # activation, stacked along sublanes -> (9*C, lp).  Rolls wrap across
        # border/tail lanes only; those are masked / never sampled downstream.
        cols = []
        for dy in range(3):
            for dx in range(3):
                off = (dy - 1) * wp + (dx - 1)
                shift = (-off) % lp
                cols.append(a if shift == 0 else pltpu.roll(a, shift, axis=1))
        return jnp.concatenate(cols, axis=0)

    def kernel(*refs):
        ins, outs = refs[:-n_blocks], refs[-n_blocks:]
        it = iter(ins)
        x = next(it)[...]                      # (C0, lp0) f32, zero border/tail
        if has_ds:
            s_mat = next(it)[...]              # (lp0, lp1) bf16 0/1 sampler
        mask = next(it)[...]                   # (1, lp_out) f32 interior mask

        fr = frames[0]
        for bi, blk in enumerate(plan):
            wa = next(it)[...]                 # (cout, 9*cin) bf16, BN folded
            sha = next(it)[...]                # (cout, 1)     f32 BN shift
            wb = next(it)[...]                 # (cout, 9*cout) bf16
            shb = next(it)[...]                # (cout, 1)     f32
            cout = blk["cout"]

            # conv_a + bn_a + relu: bf16 MXU operands, f32 accumulation.
            ya = jnp.dot(wa, conv_taps(x, fr["wp"], fr["lp"]).astype(jnp.bfloat16),
                         preferred_element_type=jnp.float32)
            ya = jnp.maximum(ya + sha, 0.0)    # f32 epilogue

            if blk["increase"]:
                # Stride-2 downsample of BOTH conv_a output and the shortcut in
                # ONE matmul: sublane-stack [ya; x] and hit the per-image 0/1
                # sampler once.  ya's border/tail lanes are never masked first:
                # this is correct ONLY because s_mat's nonzero rows are
                # restricted to interior stride-2 centers (valid conv outputs)
                # and its border/tail columns are all-zero.
                stack = jnp.concatenate([ya, x], axis=0).astype(jnp.bfloat16)
                ds = jnp.dot(stack, s_mat, preferred_element_type=jnp.float32)
                ya, sc = ds[:cout, :], ds[cout:, :]
                fr = frames[1]
            else:
                ya = ya * mask                 # re-zero border + tail lanes
                sc = x

            # conv_b + bn_b + residual add (last_relu=False).
            yb = jnp.dot(wb, conv_taps(ya, fr["wp"], fr["lp"]).astype(jnp.bfloat16),
                         preferred_element_type=jnp.float32) + shb
            if blk["increase"]:
                # PyTorch pads the shortcut with zero channels; that is an add
                # into the first cin output channels.
                yb = yb + jnp.concatenate([sc, jnp.zeros_like(sc)], axis=0)
            else:
                yb = yb + sc
            feat = yb * mask                   # re-zero padded border + tail
            outs[bi][...] = feat               # lane-dense (cout, lp_out) store
            x = jnp.maximum(feat, 0.0) if block_relu else feat

    return kernel


# ------------------------------- JAX wrapper --------------------------------

def stage_forward(x_nchw, params, *, increase_first, block_relu=False):
    """Forward of Stage([ResidualBlock, ...]) as ONE fused Pallas TPU kernel.

    Returns (intermediary_features, x) like the PyTorch module: features are
    the raw block outputs (NCHW); x is the last output, ReLU'd if block_relu.
    """
    n, c0, h, w = x_nchw.shape
    n_blocks = len(params)
    for p in params[1:]:
        assert p["w_a"].shape[0] == p["w_a"].shape[1], (
            "increase_dim is only supported for the first block of a stage")

    fr0 = _frame(h, w)
    frames = [fr0] + ([_frame(h // 2, w // 2)] if increase_first else [])
    out_fr = frames[-1]

    plan = []
    cin_cur = c0
    for i, p in enumerate(params):
        cout, cin = p["w_a"].shape[0], p["w_a"].shape[1]
        inc = increase_first and i == 0
        assert cin == cin_cur
        if inc:
            assert cout == 2 * cin, "increase_dim block must double channels"
        else:
            assert cout == cin, "non-increase block must keep channels"
        plan.append({"increase": inc, "cin": cin, "cout": cout})
        cin_cur = cout

    # -- inputs (args) and their per-grid-step BlockSpecs ------------------
    x_packed = _pack_nchw(x_nchw.astype(jnp.float32), fr0)   # (C0, N*lp0)
    args = [x_packed]
    in_specs = [pl.BlockSpec((c0, fr0["lp"]), lambda b: (0, b))]

    if increase_first:
        s_mat = _downsample_matrix(fr0, frames[1])            # bf16, per-image
        mask = _interior_mask(frames[1])
        args += [s_mat, mask]
        in_specs += [pl.BlockSpec(s_mat.shape, lambda b: (0, 0)),
                     pl.BlockSpec(mask.shape, lambda b: (0, 0))]
    else:
        mask = _interior_mask(fr0)
        args += [mask]
        in_specs += [pl.BlockSpec(mask.shape, lambda b: (0, 0))]

    for p in params:
        wka, sha = _fold_conv_bn(p["w_a"], p["gamma_a"], p["beta_a"],
                                 p["mean_a"], p["var_a"])
        wkb, shb = _fold_conv_bn(p["w_b"], p["gamma_b"], p["beta_b"],
                                 p["mean_b"], p["var_b"])
        for a in (wka, sha, wkb, shb):
            args.append(a)
            in_specs.append(pl.BlockSpec(a.shape, lambda b: (0, 0)))

    out_shape = [jax.ShapeDtypeStruct((blk["cout"], n * out_fr["lp"]), jnp.float32)
                 for blk in plan]
    out_specs = [pl.BlockSpec((blk["cout"], out_fr["lp"]), lambda b: (0, b))
                 for blk in plan]

    # Explicit VMEM limit sized from the per-step resident footprint
    # (double-buffered tiles + resident weights/sampler + in-kernel temporaries).
    per_step_bytes = c0 * fr0["lp"] * 4                       # x tile (f32)
    per_step_bytes += sum(int(np.prod(a.shape)) * a.dtype.itemsize
                          for a in args[1:])                  # sampler/mask/weights
    per_step_bytes += sum(blk["cout"] * out_fr["lp"] * 4 for blk in plan)
    vmem_limit = int(min(max(6 * per_step_bytes, 32 * 1024 * 1024),
                         48 * 1024 * 1024))

    packed = pl.pallas_call(
        _make_stage_kernel(plan, frames, block_relu),
        grid=(n,),                              # one image per grid step
        out_shape=out_shape,
        in_specs=in_specs,
        out_specs=out_specs,
        compiler_params=pltpu.CompilerParams(
            dimension_semantics=("parallel",),  # megacore-shard the batch
            vmem_limit_bytes=vmem_limit),
    )(*args)

    feats = [_unpack_nchw(y, blk["cout"], n, out_fr)
             for y, blk in zip(packed, plan)]
    x_out = jnp.maximum(feats[-1], 0.0) if block_relu else feats[-1]
    return feats, x_out


# --------------------------- parameters & reference -------------------------

def init_stage_params(key, in_channels, n_blocks, increase_dim_first=True):
    """Random ResidualBlock parameters (conv weights + inference BN stats)."""
    params, cin = [], in_channels
    for i, k in enumerate(jax.random.split(key, n_blocks)):
        increase = increase_dim_first and i == 0
        cout = cin * 2 if increase else cin
        ks = jax.random.split(k, 10)
        params.append({
            "w_a": 0.1 * jax.random.normal(ks[0], (cout, cin, 3, 3), jnp.float32),
            "gamma_a": 1.0 + 0.1 * jax.random.normal(ks[1], (cout,), jnp.float32),
            "beta_a": 0.1 * jax.random.normal(ks[2], (cout,), jnp.float32),
            "mean_a": 0.1 * jax.random.normal(ks[3], (cout,), jnp.float32),
            "var_a": 1.0 + 0.1 * jax.random.uniform(ks[4], (cout,), jnp.float32),
            "w_b": 0.1 * jax.random.normal(ks[5], (cout, cout, 3, 3), jnp.float32),
            "gamma_b": 1.0 + 0.1 * jax.random.normal(ks[6], (cout,), jnp.float32),
            "beta_b": 0.1 * jax.random.normal(ks[7], (cout,), jnp.float32),
            "mean_b": 0.1 * jax.random.normal(ks[8], (cout,), jnp.float32),
            "var_b": 1.0 + 0.1 * jax.random.uniform(ks[9], (cout,), jnp.float32),
        })
        cin = cout
    return params


def _ref_stage_forward(x, params, *, increase_first, block_relu=False):
    """Pure-JAX (XLA, f32) reference mirroring the PyTorch Stage of ResidualBlocks."""
    def bn(y, p, tag):
        s = p[f"gamma_{tag}"] / jnp.sqrt(p[f"var_{tag}"] + EPS)
        b = p[f"beta_{tag}"] - p[f"mean_{tag}"] * s
        return y * s.reshape(1, -1, 1, 1) + b.reshape(1, -1, 1, 1)

    def conv(y, wgt, stride):
        return lax.conv_general_dilated(
            y, wgt, (stride, stride), ((1, 1), (1, 1)),
            dimension_numbers=("NCHW", "OIHW", "NCHW"),
            precision=lax.Precision.HIGHEST)

    feats = []
    for i, p in enumerate(params):
        increase = increase_first and i == 0
        y = jnp.maximum(bn(conv(x, p["w_a"], 2 if increase else 1), p, "a"), 0.0)
        y = bn(conv(y, p["w_b"], 1), p, "b")
        sc = x
        if increase:
            sc = x[:, :, ::2, ::2]
            sc = jnp.concatenate([sc, jnp.zeros_like(sc)], axis=1)
        x = y + sc
        feats.append(x)
        if block_relu:
            x = jnp.maximum(x, 0.0)
    return feats, x


# --------------------------------- main -------------------------------------

if __name__ == "__main__":
    key = jax.random.PRNGKey(0)
    kx, kp = jax.random.split(key)

    # Stage like CifarResNet's stage_2 with nf=8: three ResidualBlocks, the
    # first one downsampling (stride 2) and doubling channels 8 -> 16.
    batch, cin, hw, n_blocks = 2, 8, 16, 3
    x = jax.random.normal(kx, (batch, cin, hw, hw), jnp.float32)      # NCHW
    params = init_stage_params(kp, in_channels=cin, n_blocks=n_blocks,
                               increase_dim_first=True)

    fwd = jax.jit(functools.partial(stage_forward, increase_first=True,
                                    block_relu=False))
    feats, x_out = fwd(x, params)
    jax.block_until_ready((feats, x_out))

    assert len(feats) == n_blocks
    for f in feats:
        assert f.shape == (batch, 2 * cin, hw // 2, hw // 2)
    assert x_out.shape == (batch, 2 * cin, hw // 2, hw // 2)

    # Check against a pure-XLA f32 reference (kernel uses bf16 MXU operands
    # with f32 accumulation, hence the slightly looser tolerance).
    ref_feats, ref_x = _ref_stage_forward(x, params, increase_first=True,
                                          block_relu=False)
    for got, want in zip(feats, ref_feats):
        np.testing.assert_allclose(np.asarray(got), np.asarray(want),
                                   rtol=5e-2, atol=5e-2)
    np.testing.assert_allclose(np.asarray(x_out), np.asarray(ref_x),
                               rtol=5e-2, atol=5e-2)

    print("KERNEL_OK")
</pallas_src>

<mosaic_0001>
module attributes {stable_mosaic.version = 11 : i64} {
  func.func @kernel(%arg0: i32, %arg1: memref<8x384xf32, #tpu.memory_space<vmem>>, %arg2: memref<384x128xbf16, #tpu.memory_space<vmem>>, %arg3: memref<1x128xf32, #tpu.memory_space<vmem>>, %arg4: memref<16x72xbf16, #tpu.memory_space<vmem>>, %arg5: memref<16x1xf32, #tpu.memory_space<vmem>>, %arg6: memref<16x144xbf16, #tpu.memory_space<vmem>>, %arg7: memref<16x1xf32, #tpu.memory_space<vmem>>, %arg8: memref<16x144xbf16, #tpu.memory_space<vmem>>, %arg9: memref<16x1xf32, #tpu.memory_space<vmem>>, %arg10: memref<16x144xbf16, #tpu.memory_space<vmem>>, %arg11: memref<16x1xf32, #tpu.memory_space<vmem>>, %arg12: memref<16x144xbf16, #tpu.memory_space<vmem>>, %arg13: memref<16x1xf32, #tpu.memory_space<vmem>>, %arg14: memref<16x144xbf16, #tpu.memory_space<vmem>>, %arg15: memref<16x1xf32, #tpu.memory_space<vmem>>, %arg16: memref<16x128xf32, #tpu.memory_space<vmem>>, %arg17: memref<16x128xf32, #tpu.memory_space<vmem>>, %arg18: memref<16x128xf32, #tpu.memory_space<vmem>>) attributes {dimension_semantics = [#tpu.dimension_semantics<parallel>], iteration_bounds = array<i64: 2>, scalar_prefetch = 0 : i64, scratch_operands = 0 : i64, tpu.core_type = #tpu.core_type<tc>, window_params = [{transform_indices = @transform_0, window_bounds = array<i64: 8, 384>}, {pipeline_mode = #tpu.pipeline_mode<synchronous>, transform_indices = @transform_1, window_bounds = array<i64: 384, 128>}, {pipeline_mode = #tpu.pipeline_mode<synchronous>, transform_indices = @transform_2, window_bounds = array<i64: 1, 128>}, {pipeline_mode = #tpu.pipeline_mode<synchronous>, transform_indices = @transform_3, window_bounds = array<i64: 16, 72>}, {pipeline_mode = #tpu.pipeline_mode<synchronous>, transform_indices = @transform_4, window_bounds = array<i64: 16, 1>}, {pipeline_mode = #tpu.pipeline_mode<synchronous>, transform_indices = @transform_5, window_bounds = array<i64: 16, 144>}, {pipeline_mode = #tpu.pipeline_mode<synchronous>, transform_indices = @transform_6, window_bounds = array<i64: 16, 1>}, {pipeline_mode = #tpu.pipeline_mode<synchronous>, transform_indices = @transform_7, window_bounds = array<i64: 16, 144>}, {pipeline_mode = #tpu.pipeline_mode<synchronous>, transform_indices = @transform_8, window_bounds = array<i64: 16, 1>}, {pipeline_mode = #tpu.pipeline_mode<synchronous>, transform_indices = @transform_9, window_bounds = array<i64: 16, 144>}, {pipeline_mode = #tpu.pipeline_mode<synchronous>, transform_indices = @transform_10, window_bounds = array<i64: 16, 1>}, {pipeline_mode = #tpu.pipeline_mode<synchronous>, transform_indices = @transform_11, window_bounds = array<i64: 16, 144>}, {pipeline_mode = #tpu.pipeline_mode<synchronous>, transform_indices = @transform_12, window_bounds = array<i64: 16, 1>}, {pipeline_mode = #tpu.pipeline_mode<synchronous>, transform_indices = @transform_13, window_bounds = array<i64: 16, 144>}, {pipeline_mode = #tpu.pipeline_mode<synchronous>, transform_indices = @transform_14, window_bounds = array<i64: 16, 1>}, {transform_indices = @transform_15, window_bounds = array<i64: 16, 128>}, {transform_indices = @transform_16, window_bounds = array<i64: 16, 128>}, {transform_indices = @transform_17, window_bounds = array<i64: 16, 128>}]} {
    %c0 = arith.constant 0 : index
    %c0_0 = arith.constant 0 : index
    %0 = vector.load %arg1[%c0, %c0_0] : memref<8x384xf32, #tpu.memory_space<vmem>>, vector<8x384xf32>
    %c0_1 = arith.constant 0 : index
    %c0_2 = arith.constant 0 : index
    %1 = vector.load %arg2[%c0_1, %c0_2] : memref<384x128xbf16, #tpu.memory_space<vmem>>, vector<384x128xbf16>
    %c0_3 = arith.constant 0 : index
    %c0_4 = arith.constant 0 : index
    %2 = vector.load %arg3[%c0_3, %c0_4] : memref<1x128xf32, #tpu.memory_space<vmem>>, vector<1x128xf32>
    %c0_5 = arith.constant 0 : index
    %c0_6 = arith.constant 0 : index
    %3 = vector.load %arg4[%c0_5, %c0_6] : memref<16x72xbf16, #tpu.memory_space<vmem>>, vector<16x72xbf16>
    %c0_7 = arith.constant 0 : index
    %c0_8 = arith.constant 0 : index
    %4 = vector.load %arg5[%c0_7, %c0_8] : memref<16x1xf32, #tpu.memory_space<vmem>>, vector<16x1xf32>
    %c0_9 = arith.constant 0 : index
    %c0_10 = arith.constant 0 : index
    %5 = vector.load %arg6[%c0_9, %c0_10] : memref<16x144xbf16, #tpu.memory_space<vmem>>, vector<16x144xbf16>
    %c0_11 = arith.constant 0 : index
    %c0_12 = arith.constant 0 : index
    %6 = vector.load %arg7[%c0_11, %c0_12] : memref<16x1xf32, #tpu.memory_space<vmem>>, vector<16x1xf32>
    %c19_i32 = arith.constant 19 : i32
    %7 = tpu.dynamic_rotate %0 by %c19_i32 dim 1 : vector<8x384xf32>, i32 -> vector<8x384xf32>
    %c18_i32 = arith.constant 18 : i32
    %8 = tpu.dynamic_rotate %0 by %c18_i32 dim 1 : vector<8x384xf32>, i32 -> vector<8x384xf32>
    %c17_i32 = arith.constant 17 : i32
    %9 = tpu.dynamic_rotate %0 by %c17_i32 dim 1 : vector<8x384xf32>, i32 -> vector<8x384xf32>
    %c1_i32 = arith.constant 1 : i32
    %10 = tpu.dynamic_rotate %0 by %c1_i32 dim 1 : vector<8x384xf32>, i32 -> vector<8x384xf32>
    %c383_i32 = arith.constant 383 : i32
    %11 = tpu.dynamic_rotate %0 by %c383_i32 dim 1 : vector<8x384xf32>, i32 -> vector<8x384xf32>
    %c367_i32 = arith.constant 367 : i32
    %12 = tpu.dynamic_rotate %0 by %c367_i32 dim 1 : vector<8x384xf32>, i32 -> vector<8x384xf32>
    %c366_i32 = arith.constant 366 : i32
    %13 = tpu.dynamic_rotate %0 by %c366_i32 dim 1 : vector<8x384xf32>, i32 -> vector<8x384xf32>
    %c365_i32 = arith.constant 365 : i32
    %14 = tpu.dynamic_rotate %0 by %c365_i32 dim 1 : vector<8x384xf32>, i32 -> vector<8x384xf32>
    %15 = tpu.concatenate %7, %8, %9, %10, %0, %11, %12, %13, %14 in 0 : vector<8x384xf32>, vector<8x384xf32>, vector<8x384xf32>, vector<8x384xf32>, vector<8x384xf32>, vector<8x384xf32>, vector<8x384xf32>, vector<8x384xf32>, vector<8x384xf32> -> vector<72x384xf32>
    %16 = arith.truncf %15 : vector<72x384xf32> to vector<72x384xbf16>
    %cst = arith.constant dense<0.000000e+00> : vector<16x384xf32>
    %17 = tpu.matmul %3, %16, %cst {dimension_numbers = #tpu.dot_dimension_numbers<[1], [0], [0], [1], [0, 0, 1, 1], [], []>} : vector<16x72xbf16>, vector<72x384xbf16>, vector<16x384xf32> -> vector<16x384xf32>
    %18 = vector.broadcast %4 : vector<16x1xf32> to vector<16x384xf32>
    %19 = arith.addf %17, %18 : vector<16x384xf32>
    %cst_13 = arith.constant 0.000000e+00 : f32
    %20 = vector.broadcast %cst_13 : f32 to vector<16x384xf32>
    %21 = arith.maximumf %19, %20 : vector<16x384xf32>
    %22 = tpu.concatenate %21, %0 in 0 : vector<16x384xf32>, vector<8x384xf32> -> vector<24x384xf32>
    %23 = arith.truncf %22 : vector<24x384xf32> to vector<24x384xbf16>
    %cst_14 = arith.constant dense<0.000000e+00> : vector<24x128xf32>
    %24 = tpu.matmul %23, %1, %cst_14 {dimension_numbers = #tpu.dot_dimension_numbers<[1], [0], [0], [1], [0, 0, 1, 1], [], []>} : vector<24x384xbf16>, vector<384x128xbf16>, vector<24x128xf32> -> vector<24x128xf32>
    %25 = vector.extract_strided_slice %24 {offsets = [0, 0], sizes = [16, 128], strides = [1, 1]} : vector<24x128xf32> to vector<16x128xf32>
    %26 = vector.extract_strided_slice %24 {offsets = [16, 0], sizes = [8, 128], strides = [1, 1]} : vector<24x128xf32> to vector<8x128xf32>
    %c11_i32 = arith.constant 11 : i32
    %27 = tpu.dynamic_rotate %25 by %c11_i32 dim 1 : vector<16x128xf32>, i32 -> vector<16x128xf32>
    %c10_i32 = arith.constant 10 : i32
    %28 = tpu.dynamic_rotate %25 by %c10_i32 dim 1 : vector<16x128xf32>, i32 -> vector<16x128xf32>
    %c9_i32 = arith.constant 9 : i32
    %29 = tpu.dynamic_rotate %25 by %c9_i32 dim 1 : vector<16x128xf32>, i32 -> vector<16x128xf32>
    %c1_i32_15 = arith.constant 1 : i32
    %30 = tpu.dynamic_rotate %25 by %c1_i32_15 dim 1 : vector<16x128xf32>, i32 -> vector<16x128xf32>
    %c127_i32 = arith.constant 127 : i32
    %31 = tpu.dynamic_rotate %25 by %c127_i32 dim 1 : vector<16x128xf32>, i32 -> vector<16x128xf32>
    %c119_i32 = arith.constant 119 : i32
    %32 = tpu.dynamic_rotate %25 by %c119_i32 dim 1 : vector<16x128xf32>, i32 -> vector<16x128xf32>
    %c118_i32 = arith.constant 118 : i32
    %33 = tpu.dynamic_rotate %25 by %c118_i32 dim 1 : vector<16x128xf32>, i32 -> vector<16x128xf32>
    %c117_i32 = arith.constant 117 : i32
    %34 = tpu.dynamic_rotate %25 by %c117_i32 dim 1 : vector<16x128xf32>, i32 -> vector<16x128xf32>
    %35 = tpu.concatenate %27, %28, %29, %30, %25, %31, %32, %33, %34 in 0 : vector<16x128xf32>, vector<16x128xf32>, vector<16x128xf32>, vector<16x128xf32>, vector<16x128xf32>, vector<16x128xf32>, vector<16x128xf32>, vector<16x128xf32>, vector<16x128xf32> -> vector<144x128xf32>
    %36 = arith.truncf %35 : vector<144x128xf32> to vector<144x128xbf16>
    %cst_16 = arith.constant dense<0.000000e+00> : vector<16x128xf32>
    %37 = tpu.matmul %5, %36, %cst_16 {dimension_numbers = #tpu.dot_dimension_numbers<[1], [0], [0], [1], [0, 0, 1, 1], [], []>} : vector<16x144xbf16>, vector<144x128xbf16>, vector<16x128xf32> -> vector<16x128xf32>
    %38 = vector.broadcast %6 : vector<16x1xf32> to vector<16x128xf32>
    %39 = arith.addf %37, %38 : vector<16x128xf32>
    %cst_17 = arith.constant 0.000000e+00 : f32
    %40 = vector.broadcast %cst_17 : f32 to vector<8x128xf32>
    %41 = tpu.concatenate %26, %40 in 0 : vector<8x128xf32>, vector<8x128xf32> -> vector<16x128xf32>
    %42 = arith.addf %39, %41 : vector<16x128xf32>
    %43 = vector.broadcast %2 : vector<1x128xf32> to vector<16x128xf32>
    %44 = arith.mulf %42, %43 : vector<16x128xf32>
    %c0_18 = arith.constant 0 : index
    %c0_19 = arith.constant 0 : index
    %45 = vector.load %arg16[%c0_18, %c0_19] : memref<16x128xf32, #tpu.memory_space<vmem>>, vector<16x128xf32>
    tpu.vector_store %arg16[%c0_18, %c0_19], %44 {strides = array<i32>} : memref<16x128xf32, #tpu.memory_space<vmem>>, vector<16x128xf32>,
    %c0_20 = arith.constant 0 : index
    %c0_21 = arith.constant 0 : index
    %46 = vector.load %arg8[%c0_20, %c0_21] : memref<16x144xbf16, #tpu.memory_space<vmem>>, vector<16x144xbf16>
    %c0_22 = arith.constant 0 : index
    %c0_23 = arith.constant 0 : index
    %47 = vector.load %arg9[%c0_22, %c0_23] : memref<16x1xf32, #tpu.memory_space<vmem>>, vector<16x1xf32>
    %c0_24 = arith.constant 0 : index
    %c0_25 = arith.constant 0 : index
    %48 = vector.load %arg10[%c0_24, %c0_25] : memref<16x144xbf16, #tpu.memory_space<vmem>>, vector<16x144xbf16>
    %c0_26 = arith.constant 0 : index
    %c0_27 = arith.constant 0 : index
    %49 = vector.load %arg11[%c0_26, %c0_27] : memref<16x1xf32, #tpu.memory_space<vmem>>, vector<16x1xf32>
    %c11_i32_28 = arith.constant 11 : i32
    %50 = tpu.dynamic_rotate %44 by %c11_i32_28 dim 1 : vector<16x128xf32>, i32 -> vector<16x128xf32>
    %c10_i32_29 = arith.constant 10 : i32
    %51 = tpu.dynamic_rotate %44 by %c10_i32_29 dim 1 : vector<16x128xf32>, i32 -> vector<16x128xf32>
    %c9_i32_30 = arith.constant 9 : i32
    %52 = tpu.dynamic_rotate %44 by %c9_i32_30 dim 1 : vector<16x128xf32>, i32 -> vector<16x128xf32>
    %c1_i32_31 = arith.constant 1 : i32
    %53 = tpu.dynamic_rotate %44 by %c1_i32_31 dim 1 : vector<16x128xf32>, i32 -> vector<16x128xf32>
    %c127_i32_32 = arith.constant 127 : i32
    %54 = tpu.dynamic_rotate %44 by %c127_i32_32 dim 1 : vector<16x128xf32>, i32 -> vector<16x128xf32>
    %c119_i32_33 = arith.constant 119 : i32
    %55 = tpu.dynamic_rotate %44 by %c119_i32_33 dim 1 : vector<16x128xf32>, i32 -> vector<16x128xf32>
    %c118_i32_34 = arith.constant 118 : i32
    %56 = tpu.dynamic_rotate %44 by %c118_i32_34 dim 1 : vector<16x128xf32>, i32 -> vector<16x128xf32>
    %c117_i32_35 = arith.constant 117 : i32
    %57 = tpu.dynamic_rotate %44 by %c117_i32_35 dim 1 : vector<16x128xf32>, i32 -> vector<16x128xf32>
    %58 = tpu.concatenate %50, %51, %52, %53, %44, %54, %55, %56, %57 in 0 : vector<16x128xf32>, vector<16x128xf32>, vector<16x128xf32>, vector<16x128xf32>, vector<16x128xf32>, vector<16x128xf32>, vector<16x128xf32>, vector<16x128xf32>, vector<16x128xf32> -> vector<144x128xf32>
    %59 = arith.truncf %58 : vector<144x128xf32> to vector<144x128xbf16>
    %cst_36 = arith.constant dense<0.000000e+00> : vector<16x128xf32>
    %60 = tpu.matmul %46, %59, %cst_36 {dimension_numbers = #tpu.dot_dimension_numbers<[1], [0], [0], [1], [0, 0, 1, 1], [], []>} : vector<16x144xbf16>, vector<144x128xbf16>, vector<16x128xf32> -> vector<16x128xf32>
    %61 = vector.broadcast %47 : vector<16x1xf32> to vector<16x128xf32>
    %62 = arith.addf %60, %61 : vector<16x128xf32>
    %cst_37 = arith.constant 0.000000e+00 : f32
    %63 = vector.broadcast %cst_37 : f32 to vector<16x128xf32>
    %64 = arith.maximumf %62, %63 : vector<16x128xf32>
    %65 = vector.broadcast %2 : vector<1x128xf32> to vector<16x128xf32>
    %66 = arith.mulf %64, %65 : vector<16x128xf32>
    %c11_i32_38 = arith.constant 11 : i32
    %67 = tpu.dynamic_rotate %66 by %c11_i32_38 dim 1 : vector<16x128xf32>, i32 -> vector<16x128xf32>
    %c10_i32_39 = arith.constant 10 : i32
    %68 = tpu.dynamic_rotate %66 by %c10_i32_39 dim 1 : vector<16x128xf32>, i32 -> vector<16x128xf32>
    %c9_i32_40 = arith.constant 9 : i32
    %69 = tpu.dynamic_rotate %66 by %c9_i32_40 dim 1 : vector<16x128xf32>, i32 -> vector<16x128xf32>
    %c1_i32_41 = arith.constant 1 : i32
    %70 = tpu.dynamic_rotate %66 by %c1_i32_41 dim 1 : vector<16x128xf32>, i32 -> vector<16x128xf32>
    %c127_i32_42 = arith.constant 127 : i32
    %71 = tpu.dynamic_rotate %66 by %c127_i32_42 dim 1 : vector<16x128xf32>, i32 -> vector<16x128xf32>
    %c119_i32_43 = arith.constant 119 : i32
    %72 = tpu.dynamic_rotate %66 by %c119_i32_43 dim 1 : vector<16x128xf32>, i32 -> vector<16x128xf32>
    %c118_i32_44 = arith.constant 118 : i32
    %73 = tpu.dynamic_rotate %66 by %c118_i32_44 dim 1 : vector<16x128xf32>, i32 -> vector<16x128xf32>
    %c117_i32_45 = arith.constant 117 : i32
    %74 = tpu.dynamic_rotate %66 by %c117_i32_45 dim 1 : vector<16x128xf32>, i32 -> vector<16x128xf32>
    %75 = tpu.concatenate %67, %68, %69, %70, %66, %71, %72, %73, %74 in 0 : vector<16x128xf32>, vector<16x128xf32>, vector<16x128xf32>, vector<16x128xf32>, vector<16x128xf32>, vector<16x128xf32>, vector<16x128xf32>, vector<16x128xf32>, vector<16x128xf32> -> vector<144x128xf32>
    %76 = arith.truncf %75 : vector<144x128xf32> to vector<144x128xbf16>
    %cst_46 = arith.constant dense<0.000000e+00> : vector<16x128xf32>
    %77 = tpu.matmul %48, %76, %cst_46 {dimension_numbers = #tpu.dot_dimension_numbers<[1], [0], [0], [1], [0, 0, 1, 1], [], []>} : vector<16x144xbf16>, vector<144x128xbf16>, vector<16x128xf32> -> vector<16x128xf32>
    %78 = vector.broadcast %49 : vector<16x1xf32> to vector<16x128xf32>
    %79 = arith.addf %77, %78 : vector<16x128xf32>
    %80 = arith.addf %79, %44 : vector<16x128xf32>
    %81 = vector.broadcast %2 : vector<1x128xf32> to vector<16x128xf32>
    %82 = arith.mulf %80, %81 : vector<16x128xf32>
    %c0_47 = arith.constant 0 : index
    %c0_48 = arith.constant 0 : index
    %83 = vector.load %arg17[%c0_47, %c0_48] : memref<16x128xf32, #tpu.memory_space<vmem>>, vector<16x128xf32>
    tpu.vector_store %arg17[%c0_47, %c0_48], %82 {strides = array<i32>} : memref<16x128xf32, #tpu.memory_space<vmem>>, vector<16x128xf32>,
    %c0_49 = arith.constant 0 : index
    %c0_50 = arith.constant 0 : index
    %84 = vector.load %arg12[%c0_49, %c0_50] : memref<16x144xbf16, #tpu.memory_space<vmem>>, vector<16x144xbf16>
    %c0_51 = arith.constant 0 : index
    %c0_52 = arith.constant 0 : index
    %85 = vector.load %arg13[%c0_51, %c0_52] : memref<16x1xf32, #tpu.memory_space<vmem>>, vector<16x1xf32>
    %c0_53 = arith.constant 0 : index
    %c0_54 = arith.constant 0 : index
    %86 = vector.load %arg14[%c0_53, %c0_54] : memref<16x144xbf16, #tpu.memory_space<vmem>>, vector<16x144xbf16>
    %c0_55 = arith.constant 0 : index
    %c0_56 = arith.constant 0 : index
    %87 = vector.load %arg15[%c0_55, %c0_56] : memref<16x1xf32, #tpu.memory_space<vmem>>, vector<16x1xf32>
    %c11_i32_57 = arith.constant 11 : i32
    %88 = tpu.dynamic_rotate %82 by %c11_i32_57 dim 1 : vector<16x128xf32>, i32 -> vector<16x128xf32>
    %c10_i32_58 = arith.constant 10 : i32
    %89 = tpu.dynamic_rotate %82 by %c10_i32_58 dim 1 : vector<16x128xf32>, i32 -> vector<16x128xf32>
    %c9_i32_59 = arith.constant 9 : i32
    %90 = tpu.dynamic_rotate %82 by %c9_i32_59 dim 1 : vector<16x128xf32>, i32 -> vector<16x128xf32>
    %c1_i32_60 = arith.constant 1 : i32
    %91 = tpu.dynamic_rotate %82 by %c1_i32_60 dim 1 : vector<16x128xf32>, i32 -> vector<16x128xf32>
    %c127_i32_61 = arith.constant 127 : i32
    %92 = tpu.dynamic_rotate %82 by %c127_i32_61 dim 1 : vector<16x128xf32>, i32 -> vector<16x128xf32>
    %c119_i32_62 = arith.constant 119 : i32
    %93 = tpu.dynamic_rotate %82 by %c119_i32_62 dim 1 : vector<16x128xf32>, i32 -> vector<16x128xf32>
    %c118_i32_63 = arith.constant 118 : i32
    %94 = tpu.dynamic_rotate %82 by %c118_i32_63 dim 1 : vector<16x128xf32>, i32 -> vector<16x128xf32>
    %c117_i32_64 = arith.constant 117 : i32
    %95 = tpu.dynamic_rotate %82 by %c117_i32_64 dim 1 : vector<16x128xf32>, i32 -> vector<16x128xf32>
    %96 = tpu.concatenate %88, %89, %90, %91, %82, %92, %93, %94, %95 in 0 : vector<16x128xf32>, vector<16x128xf32>, vector<16x128xf32>, vector<16x128xf32>, vector<16x128xf32>, vector<16x128xf32>, vector<16x128xf32>, vector<16x128xf32>, vector<16x128xf32> -> vector<144x128xf32>
    %97 = arith.truncf %96 : vector<144x128xf32> to vector<144x128xbf16>
    %cst_65 = arith.constant dense<0.000000e+00> : vector<16x128xf32>
    %98 = tpu.matmul %84, %97, %cst_65 {dimension_numbers = #tpu.dot_dimension_numbers<[1], [0], [0], [1], [0, 0, 1, 1], [], []>} : vector<16x144xbf16>, vector<144x128xbf16>, vector<16x128xf32> -> vector<16x128xf32>
    %99 = vector.broadcast %85 : vector<16x1xf32> to vector<16x128xf32>
    %100 = arith.addf %98, %99 : vector<16x128xf32>
    %cst_66 = arith.constant 0.000000e+00 : f32
    %101 = vector.broadcast %cst_66 : f32 to vector<16x128xf32>
    %102 = arith.maximumf %100, %101 : vector<16x128xf32>
    %103 = vector.broadcast %2 : vector<1x128xf32> to vector<16x128xf32>
    %104 = arith.mulf %102, %103 : vector<16x128xf32>
    %c11_i32_67 = arith.constant 11 : i32
    %105 = tpu.dynamic_rotate %104 by %c11_i32_67 dim 1 : vector<16x128xf32>, i32 -> vector<16x128xf32>
    %c10_i32_68 = arith.constant 10 : i32
    %106 = tpu.dynamic_rotate %104 by %c10_i32_68 dim 1 : vector<16x128xf32>, i32 -> vector<16x128xf32>
    %c9_i32_69 = arith.constant 9 : i32
    %107 = tpu.dynamic_rotate %104 by %c9_i32_69 dim 1 : vector<16x128xf32>, i32 -> vector<16x128xf32>
    %c1_i32_70 = arith.constant 1 : i32
    %108 = tpu.dynamic_rotate %104 by %c1_i32_70 dim 1 : vector<16x128xf32>, i32 -> vector<16x128xf32>
    %c127_i32_71 = arith.constant 127 : i32
    %109 = tpu.dynamic_rotate %104 by %c127_i32_71 dim 1 : vector<16x128xf32>, i32 -> vector<16x128xf32>
    %c119_i32_72 = arith.constant 119 : i32
    %110 = tpu.dynamic_rotate %104 by %c119_i32_72 dim 1 : vector<16x128xf32>, i32 -> vector<16x128xf32>
    %c118_i32_73 = arith.constant 118 : i32
    %111 = tpu.dynamic_rotate %104 by %c118_i32_73 dim 1 : vector<16x128xf32>, i32 -> vector<16x128xf32>
    %c117_i32_74 = arith.constant 117 : i32
    %112 = tpu.dynamic_rotate %104 by %c117_i32_74 dim 1 : vector<16x128xf32>, i32 -> vector<16x128xf32>
    %113 = tpu.concatenate %105, %106, %107, %108, %104, %109, %110, %111, %112 in 0 : vector<16x128xf32>, vector<16x128xf32>, vector<16x128xf32>, vector<16x128xf32>, vector<16x128xf32>, vector<16x128xf32>, vector<16x128xf32>, vector<16x128xf32>, vector<16x128xf32> -> vector<144x128xf32>
    %114 = arith.truncf %113 : vector<144x128xf32> to vector<144x128xbf16>
    %cst_75 = arith.constant dense<0.000000e+00> : vector<16x128xf32>
    %115 = tpu.matmul %86, %114, %cst_75 {dimension_numbers = #tpu.dot_dimension_numbers<[1], [0], [0], [1], [0, 0, 1, 1], [], []>} : vector<16x144xbf16>, vector<144x128xbf16>, vector<16x128xf32> -> vector<16x128xf32>
    %116 = vector.broadcast %87 : vector<16x1xf32> to vector<16x128xf32>
    %117 = arith.addf %115, %116 : vector<16x128xf32>
    %118 = arith.addf %117, %82 : vector<16x128xf32>
    %119 = vector.broadcast %2 : vector<1x128xf32> to vector<16x128xf32>
    %120 = arith.mulf %118, %119 : vector<16x128xf32>
    %c0_76 = arith.constant 0 : index
    %c0_77 = arith.constant 0 : index
    %121 = vector.load %arg18[%c0_76, %c0_77] : memref<16x128xf32, #tpu.memory_space<vmem>>, vector<16x128xf32>
    tpu.vector_store %arg18[%c0_76, %c0_77], %120 {strides = array<i32>} : memref<16x128xf32, #tpu.memory_space<vmem>>, vector<16x128xf32>,
    return
  }
  func.func @transform_0(%arg0: i32) -> (i32, i32) {
    %c0_i32 = arith.constant 0 : i32
    %c0_i32_0 = arith.constant 0 : i32
    return %c0_i32, %arg0 : i32, i32
  }
  func.func @transform_1(%arg0: i32) -> (i32, i32) {
    %c0_i32 = arith.constant 0 : i32
    %c0_i32_0 = arith.constant 0 : i32
    %c0_i32_1 = arith.constant 0 : i32
    return %c0_i32, %c0_i32_0 : i32, i32
  }
  func.func @transform_2(%arg0: i32) -> (i32, i32) {
    %c0_i32 = arith.constant 0 : i32
    %c0_i32_0 = arith.constant 0 : i32
    %c0_i32_1 = arith.constant 0 : i32
    return %c0_i32, %c0_i32_0 : i32, i32
  }
  func.func @transform_3(%arg0: i32) -> (i32, i32) {
    %c0_i32 = arith.constant 0 : i32
    %c0_i32_0 = arith.constant 0 : i32
    %c0_i32_1 = arith.constant 0 : i32
    return %c0_i32, %c0_i32_0 : i32, i32
  }
  func.func @transform_4(%arg0: i32) -> (i32, i32) {
    %c0_i32 = arith.constant 0 : i32
    %c0_i32_0 = arith.constant 0 : i32
    %c0_i32_1 = arith.constant 0 : i32
    return %c0_i32, %c0_i32_0 : i32, i32
  }
  func.func @transform_5(%arg0: i32) -> (i32, i32) {
    %c0_i32 = arith.constant 0 : i32
    %c0_i32_0 = arith.constant 0 : i32
    %c0_i32_1 = arith.constant 0 : i32
    return %c0_i32, %c0_i32_0 : i32, i32
  }
  func.func @transform_6(%arg0: i32) -> (i32, i32) {
    %c0_i32 = arith.constant 0 : i32
    %c0_i32_0 = arith.constant 0 : i32
    %c0_i32_1 = arith.constant 0 : i32
    return %c0_i32, %c0_i32_0 : i32, i32
  }
  func.func @transform_7(%arg0: i32) -> (i32, i32) {
    %c0_i32 = arith.constant 0 : i32
    %c0_i32_0 = arith.constant 0 : i32
    %c0_i32_1 = arith.constant 0 : i32
    return %c0_i32, %c0_i32_0 : i32, i32
  }
  func.func @transform_8(%arg0: i32) -> (i32, i32) {
    %c0_i32 = arith.constant 0 : i32
    %c0_i32_0 = arith.constant 0 : i32
    %c0_i32_1 = arith.constant 0 : i32
    return %c0_i32, %c0_i32_0 : i32, i32
  }
  func.func @transform_9(%arg0: i32) -> (i32, i32) {
    %c0_i32 = arith.constant 0 : i32
    %c0_i32_0 = arith.constant 0 : i32
    %c0_i32_1 = arith.constant 0 : i32
    return %c0_i32, %c0_i32_0 : i32, i32
  }
  func.func @transform_10(%arg0: i32) -> (i32, i32) {
    %c0_i32 = arith.constant 0 : i32
    %c0_i32_0 = arith.constant 0 : i32
    %c0_i32_1 = arith.constant 0 : i32
    return %c0_i32, %c0_i32_0 : i32, i32
  }
  func.func @transform_11(%arg0: i32) -> (i32, i32) {
    %c0_i32 = arith.constant 0 : i32
    %c0_i32_0 = arith.constant 0 : i32
    %c0_i32_1 = arith.constant 0 : i32
    return %c0_i32, %c0_i32_0 : i32, i32
  }
  func.func @transform_12(%arg0: i32) -> (i32, i32) {
    %c0_i32 = arith.constant 0 : i32
    %c0_i32_0 = arith.constant 0 : i32
    %c0_i32_1 = arith.constant 0 : i32
    return %c0_i32, %c0_i32_0 : i32, i32
  }
  func.func @transform_13(%arg0: i32) -> (i32, i32) {
    %c0_i32 = arith.constant 0 : i32
    %c0_i32_0 = arith.constant 0 : i32
    %c0_i32_1 = arith.constant 0 : i32
    return %c0_i32, %c0_i32_0 : i32, i32
  }
  func.func @transform_14(%arg0: i32) -> (i32, i32) {
    %c0_i32 = arith.constant 0 : i32
    %c0_i32_0 = arith.constant 0 : i32
    %c0_i32_1 = arith.constant 0 : i32
    return %c0_i32, %c0_i32_0 : i32, i32
  }
  func.func @transform_15(%arg0: i32) -> (i32, i32) {
    %c0_i32 = arith.constant 0 : i32
    %c0_i32_0 = arith.constant 0 : i32
    return %c0_i32, %arg0 : i32, i32
  }
  func.func @transform_16(%arg0: i32) -> (i32, i32) {
    %c0_i32 = arith.constant 0 : i32
    %c0_i32_0 = arith.constant 0 : i32
    return %c0_i32, %arg0 : i32, i32
  }
  func.func @transform_17(%arg0: i32) -> (i32, i32) {
    %c0_i32 = arith.constant 0 : i32
    %c0_i32_0 = arith.constant 0 : i32
    return %c0_i32, %arg0 : i32, i32
  }
}

</mosaic_0001>

<llo_original>
// kernel: stage_forward.1
$region0: #{stage_forward.1}
  #allocation0 [shape = 'u32[]', space=smem, size = 0x4, offset = 0x4, fixed_abs, tag = 'smem constant byte address 0x4 - core index']
  #allocation1 [shape = 'u32[144,128]{1,0:T(1,128)}', space=vmem, size = 0x12000, scoped, tag = 'internal scratch']
  %s0 = inlined_call_operand.vmem [shape: f32[8,768], index: 0, kind: input, shape index: {}]
  %s1 = inlined_call_operand.vmem [shape: bf16[384,128], index: 1, kind: input, shape index: {}]
  %s2 = inlined_call_operand.vmem [shape: f32[1,128], index: 2, kind: input, shape index: {}]
  %s3 = inlined_call_operand.vmem [shape: bf16[16,72], index: 3, kind: input, shape index: {}]
  %s4 = inlined_call_operand.vmem [shape: f32[16,1], index: 4, kind: input, shape index: {}]
  %s5 = inlined_call_operand.vmem [shape: bf16[16,144], index: 5, kind: input, shape index: {}]
  %s6 = inlined_call_operand.vmem [shape: f32[16,1], index: 6, kind: input, shape index: {}]
  %s7 = inlined_call_operand.vmem [shape: bf16[16,144], index: 7, kind: input, shape index: {}]
  %s8 = inlined_call_operand.vmem [shape: f32[16,1], index: 8, kind: input, shape index: {}]
  %s9 = inlined_call_operand.vmem [shape: bf16[16,144], index: 9, kind: input, shape index: {}]
  %s10 = inlined_call_operand.vmem [shape: f32[16,1], index: 10, kind: input, shape index: {}]
  %s11 = inlined_call_operand.vmem [shape: bf16[16,144], index: 11, kind: input, shape index: {}]
  %s12 = inlined_call_operand.vmem [shape: f32[16,1], index: 12, kind: input, shape index: {}]
  %s13 = inlined_call_operand.vmem [shape: bf16[16,144], index: 13, kind: input, shape index: {}]
  %s14 = inlined_call_operand.vmem [shape: f32[16,1], index: 14, kind: input, shape index: {}]
  %s15 = inlined_call_operand.vmem [shape: f32[16,256], index: 15, kind: output, shape index: {0}]
  %s16 = inlined_call_operand.vmem [shape: f32[16,256], index: 16, kind: output, shape index: {1}]
  %s17 = inlined_call_operand.vmem [shape: f32[16,256], index: 17, kind: output, shape index: {2}]
  %18 = xla_tuple %s15, %s16, %s17
  %s19 = sld [smem:[#allocation0]]
  $region211: #{stage_forward.1} parent=0
    _
  %s21 = ssub.s32 1, %s19
  %s22 = scalar_select 0, %s21, %s19
  $region1: #{stage_forward.1} parent=0
    #allocation2 [shape = 'u8[16384]{0}', space=vmem, size = 0x4000, scoped, tag = 'output window, operand 0']
    #allocation3 [shape = 'u8[16384]{0}', space=vmem, size = 0x4000, scoped, tag = 'output window, operand 1']
    #allocation4 [shape = 'u8[16384]{0}', space=vmem, size = 0x4000, scoped, tag = 'output window, operand 2']
    loop: start=0, step=1, limit=4
    $region2: #{stage_forward.1} parent=1 // loop_pre_header
      _
    $region3: #{stage_forward.1} parent=1 // loop_header
      %s24 = sphi 0, %s28
      %p25 = scmp.ge.s32.totalorder %s24, 4
      %s34 = sphi 0, %s36
      %s37 = sphi 0, %s34
      %s38 = sphi 0, %s37
      %s54 = sphi 0, %s38
      %s58 = sphi 0, %s58
      %s60 = sphi 0, %s58
      %s61 = sphi 0, %s60
      %s75 = sphi 0, %s61
      %s79 = sphi 0, %s79
      %s81 = sphi 0, %s79
      %s82 = sphi 0, %s81
      %s96 = sphi 0, %s82
      %s100 = sphi 0, %s100
      %s102 = sphi 0, %s100
      %s103 = sphi 0, %s102
      %s117 = sphi 0, %s103
      %s121 = sphi 0, %s121
      %s123 = sphi 0, %s121
      %s124 = sphi 0, %s123
      %s138 = sphi 0, %s124
      %s142 = sphi 0, %s142
      %s144 = sphi 0, %s142
      %s145 = sphi 0, %s144
      %s159 = sphi 0, %s145
      %s163 = sphi 0, %s163
      %s165 = sphi 0, %s163
      %s166 = sphi 0, %s165
      %s180 = sphi 0, %s166
      %s184 = sphi 0, %s184
      %s186 = sphi 0, %s184
      %s187 = sphi 0, %s186
      %s201 = sphi 0, %s187
      %s205 = sphi 0, %s205
      %s207 = sphi 0, %s205
      %s208 = sphi 0, %s207
      %s222 = sphi 0, %s208
      %s226 = sphi 0, %s226
      %s228 = sphi 0, %s226
      %s229 = sphi 0, %s228
      %s243 = sphi 0, %s229
      %s247 = sphi 0, %s247
      %s249 = sphi 0, %s247
      %s250 = sphi 0, %s249
      %s264 = sphi 0, %s250
      %s268 = sphi 0, %s268
      %s270 = sphi 0, %s268
      %s271 = sphi 0, %s270
      %s285 = sphi 0, %s271
      %s289 = sphi 0, %s289
      %s291 = sphi 0, %s289
      %s292 = sphi 0, %s291
      %s306 = sphi 0, %s292
      %s310 = sphi 0, %s310
      %s312 = sphi 0, %s310
      %s313 = sphi 0, %s312
      %s327 = sphi 0, %s313
      %s331 = sphi 0, %s331
      %s333 = sphi 0, %s331
      %s334 = sphi 0, %s333
      %s348 = sphi 0, %s334
      %s354 = sphi 0, %s356
      %s357 = sphi 0, %s354
      %s358 = sphi 0, %s357
      %s374 = sphi 0, %s358
      %s380 = sphi 0, %s382
      %s383 = sphi 0, %s380
      %s384 = sphi 0, %s383
      %s400 = sphi 0, %s384
      %s406 = sphi 0, %s408
      %s409 = sphi 0, %s406
      %s410 = sphi 0, %s409
      %s426 = sphi 0, %s410
    $region4: #{stage_forward.1} parent=1 // loop_header_branch
      %27 = sbr.rel (%p25) target = $region8
    $region5: #{stage_forward.1} parent=1 // loop_body
      %s29 = ssub.s32 %s24, 1
      %s30 = ssub.s32 %s24, 2
      %s31 = sadd.s32 %s24, 1
      %s32 = ssub.s32 %s24, %s31
      %p33 = scmp.eq.s32.totalorder %s32, 0
      %s35 = sadd.s32 %s34, 1
      %s36 = scalar_select %p33, %s34, %s35
      %p39 = pneg %p33
      %p40 = scmp.eq.s32.totalorder %s24, 1
      %p41 = por %p39, %p40
      %p42 = scmp.ne.s32.totalorder %s34, %s37
      %p43 = scmp.eq.s32.totalorder %s24, 0
      %p44 = por %p42, %p43
      %p45 = scmp.ne.s32.totalorder %s34, %s37
      %p46 = scmp.eq.s32.totalorder %s29, 1
      %p47 = por %p45, %p46
      %p48 = scmp.ne.s32.totalorder %s37, %s38
      %p49 = scmp.eq.s32.totalorder %s29, 0
      %p50 = por %p48, %p49
      %p51 = scmp.ne.s32.totalorder %s37, %s38
      %p52 = scmp.eq.s32.totalorder %s30, 1
      %p53 = por %p51, %p52
      %p55 = scmp.ne.s32.totalorder %s38, %s54
      %p56 = scmp.eq.s32.totalorder %s30, 0
      %p57 = por %p55, %p56
      %s59 = sadd.s32 %s58, 1
      %p62 = scmp.eq.s32.totalorder %s24, 1
      %p63 = scmp.ne.s32.totalorder %s58, %s60
      %p64 = scmp.eq.s32.totalorder %s24, 0
      %p65 = por %p63, %p64
      %p66 = scmp.ne.s32.totalorder %s58, %s60
      %p67 = scmp.eq.s32.totalorder %s29, 1
      %p68 = por %p66, %p67
      %p69 = scmp.ne.s32.totalorder %s60, %s61
      %p70 = scmp.eq.s32.totalorder %s29, 0
      %p71 = por %p69, %p70
      %p72 = scmp.ne.s32.totalorder %s60, %s61
      %p73 = scmp.eq.s32.totalorder %s30, 1
      %p74 = por %p72, %p73
      %p76 = scmp.ne.s32.totalorder %s61, %s75
      %p77 = scmp.eq.s32.totalorder %s30, 0
      %p78 = por %p76, %p77
      %s80 = sadd.s32 %s79, 1
      %p83 = scmp.eq.s32.totalorder %s24, 1
      %p84 = scmp.ne.s32.totalorder %s79, %s81
      %p85 = scmp.eq.s32.totalorder %s24, 0
      %p86 = por %p84, %p85
      %p87 = scmp.ne.s32.totalorder %s79, %s81
      %p88 = scmp.eq.s32.totalorder %s29, 1
      %p89 = por %p87, %p88
      %p90 = scmp.ne.s32.totalorder %s81, %s82
      %p91 = scmp.eq.s32.totalorder %s29, 0
      %p92 = por %p90, %p91
      %p93 = scmp.ne.s32.totalorder %s81, %s82
      %p94 = scmp.eq.s32.totalorder %s30, 1
      %p95 = por %p93, %p94
      %p97 = scmp.ne.s32.totalorder %s82, %s96
      %p98 = scmp.eq.s32.totalorder %s30, 0
      %p99 = por %p97, %p98
      %s101 = sadd.s32 %s100, 1
      %p104 = scmp.eq.s32.totalorder %s24, 1
      %p105 = scmp.ne.s32.totalorder %s100, %s102
      %p106 = scmp.eq.s32.totalorder %s24, 0
      %p107 = por %p105, %p106
      %p108 = scmp.ne.s32.totalorder %s100, %s102
      %p109 = scmp.eq.s32.totalorder %s29, 1
      %p110 = por %p108, %p109
      %p111 = scmp.ne.s32.totalorder %s102, %s103
      %p112 = scmp.eq.s32.totalorder %s29, 0
      %p113 = por %p111, %p112
      %p114 = scmp.ne.s32.totalorder %s102, %s103
      %p115 = scmp.eq.s32.totalorder %s30, 1
      %p116 = por %p114, %p115
      %p118 = scmp.ne.s32.totalorder %s103, %s117
      %p119 = scmp.eq.s32.totalorder %s30, 0
      %p120 = por %p118, %p119
      %s122 = sadd.s32 %s121, 1
      %p125 = scmp.eq.s32.totalorder %s24, 1
      %p126 = scmp.ne.s32.totalorder %s121, %s123
      %p127 = scmp.eq.s32.totalorder %s24, 0
      %p128 = por %p126, %p127
      %p129 = scmp.ne.s32.totalorder %s121, %s123
      %p130 = scmp.eq.s32.totalorder %s29, 1
      %p131 = por %p129, %p130
      %p132 = scmp.ne.s32.totalorder %s123, %s124
      %p133 = scmp.eq.s32.totalorder %s29, 0
      %p134 = por %p132, %p133
      %p135 = scmp.ne.s32.totalorder %s123, %s124
      %p136 = scmp.eq.s32.totalorder %s30, 1
      %p137 = por %p135, %p136
      %p139 = scmp.ne.s32.totalorder %s124, %s138
      %p140 = scmp.eq.s32.totalorder %s30, 0
      %p141 = por %p139, %p140
      %s143 = sadd.s32 %s142, 1
      %p146 = scmp.eq.s32.totalorder %s24, 1
      %p147 = scmp.ne.s32.totalorder %s142, %s144
      %p148 = scmp.eq.s32.totalorder %s24, 0
      %p149 = por %p147, %p148
      %p150 = scmp.ne.s32.totalorder %s142, %s144
      %p151 = scmp.eq.s32.totalorder %s29, 1
      %p152 = por %p150, %p151
      %p153 = scmp.ne.s32.totalorder %s144, %s145
      %p154 = scmp.eq.s32.totalorder %s29, 0
      %p155 = por %p153, %p154
      %p156 = scmp.ne.s32.totalorder %s144, %s145
      %p157 = scmp.eq.s32.totalorder %s30, 1
      %p158 = por %p156, %p157
      %p160 = scmp.ne.s32.totalorder %s145, %s159
      %p161 = scmp.eq.s32.totalorder %s30, 0
      %p162 = por %p160, %p161
      %s164 = sadd.s32 %s163, 1
      %p167 = scmp.eq.s32.totalorder %s24, 1
      %p168 = scmp.ne.s32.totalorder %s163, %s165
      %p169 = scmp.eq.s32.totalorder %s24, 0
      %p170 = por %p168, %p169
      %p171 = scmp.ne.s32.totalorder %s163, %s165
      %p172 = scmp.eq.s32.totalorder %s29, 1
      %p173 = por %p171, %p172
      %p174 = scmp.ne.s32.totalorder %s165, %s166
      %p175 = scmp.eq.s32.totalorder %s29, 0
      %p176 = por %p174, %p175
      %p177 = scmp.ne.s32.totalorder %s165, %s166
      %p178 = scmp.eq.s32.totalorder %s30, 1
      %p179 = por %p177, %p178
      %p181 = scmp.ne.s32.totalorder %s166, %s180
      %p182 = scmp.eq.s32.totalorder %s30, 0
      %p183 = por %p181, %p182
      %s185 = sadd.s32 %s184, 1
      %p188 = scmp.eq.s32.totalorder %s24, 1
      %p189 = scmp.ne.s32.totalorder %s184, %s186
      %p190 = scmp.eq.s32.totalorder %s24, 0
      %p191 = por %p189, %p190
      %p192 = scmp.ne.s32.totalorder %s184, %s186
      %p193 = scmp.eq.s32.totalorder %s29, 1
      %p194 = por %p192, %p193
      %p195 = scmp.ne.s32.totalorder %s186, %s187
      %p196 = scmp.eq.s32.totalorder %s29, 0
      %p197 = por %p195, %p196
      %p198 = scmp.ne.s32.totalorder %s186, %s187
      %p199 = scmp.eq.s32.totalorder %s30, 1
      %p200 = por %p198, %p199
      %p202 = scmp.ne.s32.totalorder %s187, %s201
      %p203 = scmp.eq.s32.totalorder %s30, 0
      %p204 = por %p202, %p203
      %s206 = sadd.s32 %s205, 1
      %p209 = scmp.eq.s32.totalorder %s24, 1
      %p210 = scmp.ne.s32.totalorder %s205, %s207
      %p211 = scmp.eq.s32.totalorder %s24, 0
      %p212 = por %p210, %p211
      %p213 = scmp.ne.s32.totalorder %s205, %s207
      %p214 = scmp.eq.s32.totalorder %s29, 1
      %p215 = por %p213, %p214
      %p216 = scmp.ne.s32.totalorder %s207, %s208
      %p217 = scmp.eq.s32.totalorder %s29, 0
      %p218 = por %p216, %p217
      %p219 = scmp.ne.s32.totalorder %s207, %s208
      %p220 = scmp.eq.s32.totalorder %s30, 1
      %p221 = por %p219, %p220
      %p223 = scmp.ne.s32.totalorder %s208, %s222
      %p224 = scmp.eq.s32.totalorder %s30, 0
      %p225 = por %p223, %p224
      %s227 = sadd.s32 %s226, 1
      %p230 = scmp.eq.s32.totalorder %s24, 1
      %p231 = scmp.ne.s32.totalorder %s226, %s228
      %p232 = scmp.eq.s32.totalorder %s24, 0
      %p233 = por %p231, %p232
      %p234 = scmp.ne.s32.totalorder %s226, %s228
      %p235 = scmp.eq.s32.totalorder %s29, 1
      %p236 = por %p234, %p235
      %p237 = scmp.ne.s32.totalorder %s228, %s229
      %p238 = scmp.eq.s32.totalorder %s29, 0
      %p239 = por %p237, %p238
      %p240 = scmp.ne.s32.totalorder %s228, %s229
      %p241 = scmp.eq.s32.totalorder %s30, 1
      %p242 = por %p240, %p241
      %p244 = scmp.ne.s32.totalorder %s229, %s243
      %p245 = scmp.eq.s32.totalorder %s30, 0
      %p246 = por %p244, %p245
      %s248 = sadd.s32 %s247, 1
      %p251 = scmp.eq.s32.totalorder %s24, 1
      %p252 = scmp.ne.s32.totalorder %s247, %s249
      %p253 = scmp.eq.s32.totalorder %s24, 0
      %p254 = por %p252, %p253
      %p255 = scmp.ne.s32.totalorder %s247, %s249
      %p256 = scmp.eq.s32.totalorder %s29, 1
      %p257 = por %p255, %p256
      %p258 = scmp.ne.s32.totalorder %s249, %s250
      %p259 = scmp.eq.s32.totalorder %s29, 0
      %p260 = por %p258, %p259
      %p261 = scmp.ne.s32.totalorder %s249, %s250
      %p262 = scmp.eq.s32.totalorder %s30, 1
      %p263 = por %p261, %p262
      %p265 = scmp.ne.s32.totalorder %s250, %s264
      %p266 = scmp.eq.s32.totalorder %s30, 0
      %p267 = por %p265, %p266
      %s269 = sadd.s32 %s268, 1
      %p272 = scmp.eq.s32.totalorder %s24, 1
      %p273 = scmp.ne.s32.totalorder %s268, %s270
      %p274 = scmp.eq.s32.totalorder %s24, 0
      %p275 = por %p273, %p274
      %p276 = scmp.ne.s32.totalorder %s268, %s270
      %p277 = scmp.eq.s32.totalorder %s29, 1
      %p278 = por %p276, %p277
      %p279 = scmp.ne.s32.totalorder %s270, %s271
      %p280 = scmp.eq.s32.totalorder %s29, 0
      %p281 = por %p279, %p280
      %p282 = scmp.ne.s32.totalorder %s270, %s271
      %p283 = scmp.eq.s32.totalorder %s30, 1
      %p284 = por %p282, %p283
      %p286 = scmp.ne.s32.totalorder %s271, %s285
      %p287 = scmp.eq.s32.totalorder %s30, 0
      %p288 = por %p286, %p287
      %s290 = sadd.s32 %s289, 1
      %p293 = scmp.eq.s32.totalorder %s24, 1
      %p294 = scmp.ne.s32.totalorder %s289, %s291
      %p295 = scmp.eq.s32.totalorder %s24, 0
      %p296 = por %p294, %p295
      %p297 = scmp.ne.s32.totalorder %s289, %s291
      %p298 = scmp.eq.s32.totalorder %s29, 1
      %p299 = por %p297, %p298
      %p300 = scmp.ne.s32.totalorder %s291, %s292
      %p301 = scmp.eq.s32.totalorder %s29, 0
      %p302 = por %p300, %p301
      %p303 = scmp.ne.s32.totalorder %s291, %s292
      %p304 = scmp.eq.s32.totalorder %s30, 1
      %p305 = por %p303, %p304
      %p307 = scmp.ne.s32.totalorder %s292, %s306
      %p308 = scmp.eq.s32.totalorder %s30, 0
      %p309 = por %p307, %p308
      %s311 = sadd.s32 %s310, 1
      %p314 = scmp.eq.s32.totalorder %s24, 1
      %p315 = scmp.ne.s32.totalorder %s310, %s312
      %p316 = scmp.eq.s32.totalorder %s24, 0
      %p317 = por %p315, %p316
      %p318 = scmp.ne.s32.totalorder %s310, %s312
      %p319 = scmp.eq.s32.totalorder %s29, 1
      %p320 = por %p318, %p319
      %p321 = scmp.ne.s32.totalorder %s312, %s313
      %p322 = scmp.eq.s32.totalorder %s29, 0
      %p323 = por %p321, %p322
      %p324 = scmp.ne.s32.totalorder %s312, %s313
      %p325 = scmp.eq.s32.totalorder %s30, 1
      %p326 = por %p324, %p325
      %p328 = scmp.ne.s32.totalorder %s313, %s327
      %p329 = scmp.eq.s32.totalorder %s30, 0
      %p330 = por %p328, %p329
      %s332 = sadd.s32 %s331, 1
      %p335 = scmp.eq.s32.totalorder %s24, 1
      %p336 = scmp.ne.s32.totalorder %s331, %s333
      %p337 = scmp.eq.s32.totalorder %s24, 0
      %p338 = por %p336, %p337
      %p339 = scmp.ne.s32.totalorder %s331, %s333
      %p340 = scmp.eq.s32.totalorder %s29, 1
      %p341 = por %p339, %p340
      %p342 = scmp.ne.s32.totalorder %s333, %s334
      %p343 = scmp.eq.s32.totalorder %s29, 0
      %p344 = por %p342, %p343
      %p345 = scmp.ne.s32.totalorder %s333, %s334
      %p346 = scmp.eq.s32.totalorder %s30, 1
      %p347 = por %p345, %p346
      %p349 = scmp.ne.s32.totalorder %s334, %s348
      %p350 = scmp.eq.s32.totalorder %s30, 0
      %p351 = por %p349, %p350
      %s352 = ssub.s32 %s24, %s31
      %p353 = scmp.eq.s32.totalorder %s352, 0
      %s355 = sadd.s32 %s354, 1
      %s356 = scalar_select %p353, %s354, %s355
      %p359 = pneg %p353
      %p360 = scmp.eq.s32.totalorder %s24, 1
      %p361 = por %p359, %p360
      %p362 = scmp.ne.s32.totalorder %s354, %s357
      %p363 = scmp.eq.s32.totalorder %s24, 0
      %p364 = por %p362, %p363
      %p365 = scmp.ne.s32.totalorder %s354, %s357
      %p366 = scmp.eq.s32.totalorder %s29, 1
      %p367 = por %p365, %p366
      %p368 = scmp.ne.s32.totalorder %s357, %s358
      %p369 = scmp.eq.s32.totalorder %s29, 0
      %p370 = por %p368, %p369
      %p371 = scmp.ne.s32.totalorder %s357, %s358
      %p372 = scmp.eq.s32.totalorder %s30, 1
      %p373 = por %p371, %p372
      %p375 = scmp.ne.s32.totalorder %s358, %s374
      %p376 = scmp.eq.s32.totalorder %s30, 0
      %p377 = por %p375, %p376
      %s378 = ssub.s32 %s24, %s31
      %p379 = scmp.eq.s32.totalorder %s378, 0
      %s381 = sadd.s32 %s380, 1
      %s382 = scalar_select %p379, %s380, %s381
      %p385 = pneg %p379
      %p386 = scmp.eq.s32.totalorder %s24, 1
      %p387 = por %p385, %p386
      %p388 = scmp.ne.s32.totalorder %s380, %s383
      %p389 = scmp.eq.s32.totalorder %s24, 0
      %p390 = por %p388, %p389
      %p391 = scmp.ne.s32.totalorder %s380, %s383
      %p392 = scmp.eq.s32.totalorder %s29, 1
      %p393 = por %p391, %p392
      %p394 = scmp.ne.s32.totalorder %s383, %s384
      %p395 = scmp.eq.s32.totalorder %s29, 0
      %p396 = por %p394, %p395
      %p397 = scmp.ne.s32.totalorder %s383, %s384
      %p398 = scmp.eq.s32.totalorder %s30, 1
      %p399 = por %p397, %p398
      %p401 = scmp.ne.s32.totalorder %s384, %s400
      %p402 = scmp.eq.s32.totalorder %s30, 0
      %p403 = por %p401, %p402
      %s404 = ssub.s32 %s24, %s31
      %p405 = scmp.eq.s32.totalorder %s404, 0
      %s407 = sadd.s32 %s406, 1
      %s408 = scalar_select %p405, %s406, %s407
      %p411 = pneg %p405
      %p412 = scmp.eq.s32.totalorder %s24, 1
      %p413 = por %p411, %p412
      %p414 = scmp.ne.s32.totalorder %s406, %s409
      %p415 = scmp.eq.s32.totalorder %s24, 0
      %p416 = por %p414, %p415
      %p417 = scmp.ne.s32.totalorder %s406, %s409
      %p418 = scmp.eq.s32.totalorder %s29, 1
      %p419 = por %p417, %p418
      %p420 = scmp.ne.s32.totalorder %s409, %s410
      %p421 = scmp.eq.s32.totalorder %s29, 0
      %p422 = por %p420, %p421
      %p423 = scmp.ne.s32.totalorder %s409, %s410
      %p424 = scmp.eq.s32.totalorder %s30, 1
      %p425 = por %p423, %p424
      %p427 = scmp.ne.s32.totalorder %s410, %s426
      %p428 = scmp.eq.s32.totalorder %s30, 0
      %p429 = por %p427, %p428
      %p430 = scmp.le.s32.totalorder 1, %s24
      %p431 = scmp.lt.s32.totalorder %s24, 3
      %p432 = pnand %p430, %p431
      %p433 = pneg %p432
      // Predicated region
      $region9: #{stage_forward.1} parent=5 // pred_check
        _
      $region10: #{stage_forward.1} parent=5 // pred_check_branch
        %435 = sbr.rel (%p432) target = $region12
      $region11: #{stage_forward.1} parent=5 // pred_region
        %s436 = ssub.s32 %s24, 1
        // Predicated region
        $region13: #{stage_forward.1} parent=11 // pred_check
          %p437 = pneg %p71
        $region14: #{stage_forward.1} parent=11 // pred_check_branch
          %439 = sbr.rel (%p437) target = $region16
        $region15: #{stage_forward.1} parent=11 // pred_region
          _
        $region16: #{stage_forward.1} parent=11 // pred_fallthru
          _
        // Predicated region
        $region17: #{stage_forward.1} parent=11 // pred_check
          %p440 = pneg %p92
        $region18: #{stage_forward.1} parent=11 // pred_check_branch
          %442 = sbr.rel (%p440) target = $region20
        $region19: #{stage_forward.1} parent=11 // pred_region
          _
        $region20: #{stage_forward.1} parent=11 // pred_fallthru
          _
        // Predicated region
        $region21: #{stage_forward.1} parent=11 // pred_check
          %p443 = pneg %p113
        $region22: #{stage_forward.1} parent=11 // pred_check_branch
          %445 = sbr.rel (%p443) target = $region24
        $region23: #{stage_forward.1} parent=11 // pred_region
          _
        $region24: #{stage_forward.1} parent=11 // pred_fallthru
          _
        // Predicated region
        $region25: #{stage_forward.1} parent=11 // pred_check
          %p446 = pneg %p134
        $region26: #{stage_forward.1} parent=11 // pred_check_branch
          %448 = sbr.rel (%p446) target = $region28
        $region27: #{stage_forward.1} parent=11 // pred_region
          _
        $region28: #{stage_forward.1} parent=11 // pred_fallthru
          _
        // Predicated region
        $region29: #{stage_forward.1} parent=11 // pred_check
          %p449 = pneg %p155
        $region30: #{stage_forward.1} parent=11 // pred_check_branch
          %451 = sbr.rel (%p449) target = $region32
        $region31: #{stage_forward.1} parent=11 // pred_region
          _
        $region32: #{stage_forward.1} parent=11 // pred_fallthru
          _
        // Predicated region
        $region33: #{stage_forward.1} parent=11 // pred_check
          %p452 = pneg %p176
        $region34: #{stage_forward.1} parent=11 // pred_check_branch
          %454 = sbr.rel (%p452) target = $region36
        $region35: #{stage_forward.1} parent=11 // pred_region
          _
        $region36: #{stage_forward.1} parent=11 // pred_fallthru
          _
        // Predicated region
        $region37: #{stage_forward.1} parent=11 // pred_check
          %p455 = pneg %p197
        $region38: #{stage_forward.1} parent=11 // pred_check_branch
          %457 = sbr.rel (%p455) target = $region40
        $region39: #{stage_forward.1} parent=11 // pred_region
          _
        $region40: #{stage_forward.1} parent=11 // pred_fallthru
          _
        // Predicated region
        $region41: #{stage_forward.1} parent=11 // pred_check
          %p458 = pneg %p218
        $region42: #{stage_forward.1} parent=11 // pred_check_branch
          %460 = sbr.rel (%p458) target = $region44
        $region43: #{stage_forward.1} parent=11 // pred_region
          _
        $region44: #{stage_forward.1} parent=11 // pred_fallthru
          _
        // Predicated region
        $region45: #{stage_forward.1} parent=11 // pred_check
          %p461 = pneg %p239
        $region46: #{stage_forward.1} parent=11 // pred_check_branch
          %463 = sbr.rel (%p461) target = $region48
        $region47: #{stage_forward.1} parent=11 // pred_region
          _
        $region48: #{stage_forward.1} parent=11 // pred_fallthru
          _
        // Predicated region
        $region49: #{stage_forward.1} parent=11 // pred_check
          %p464 = pneg %p260
        $region50: #{stage_forward.1} parent=11 // pred_check_branch
          %466 = sbr.rel (%p464) target = $region52
        $region51: #{stage_forward.1} parent=11 // pred_region
          _
        $region52: #{stage_forward.1} parent=11 // pred_fallthru
          _
        // Predicated region
        $region53: #{stage_forward.1} parent=11 // pred_check
          %p467 = pneg %p281
        $region54: #{stage_forward.1} parent=11 // pred_check_branch
          %469 = sbr.rel (%p467) target = $region56
        $region55: #{stage_forward.1} parent=11 // pred_region
          _
        $region56: #{stage_forward.1} parent=11 // pred_fallthru
          _
        // Predicated region
        $region57: #{stage_forward.1} parent=11 // pred_check
          %p470 = pneg %p302
        $region58: #{stage_forward.1} parent=11 // pred_check_branch
          %472 = sbr.rel (%p470) target = $region60
        $region59: #{stage_forward.1} parent=11 // pred_region
          _
        $region60: #{stage_forward.1} parent=11 // pred_fallthru
          _
        // Predicated region
        $region61: #{stage_forward.1} parent=11 // pred_check
          %p473 = pneg %p323
        $region62: #{stage_forward.1} parent=11 // pred_check_branch
          %475 = sbr.rel (%p473) target = $region64
        $region63: #{stage_forward.1} parent=11 // pred_region
          _
        $region64: #{stage_forward.1} parent=11 // pred_fallthru
          _
        // Predicated region
        $region65: #{stage_forward.1} parent=11 // pred_check
          %p476 = pneg %p344
        $region66: #{stage_forward.1} parent=11 // pred_check_branch
          %478 = sbr.rel (%p476) target = $region68
        $region67: #{stage_forward.1} parent=11 // pred_region
          _
        $region68: #{stage_forward.1} parent=11 // pred_fallthru
          _
      $region12: #{stage_forward.1} parent=5 // pred_fallthru
        _
      %p479 = scmp.lt.s32.totalorder %s24, 2
      // Predicated region
      $region69: #{stage_forward.1} parent=5 // pred_check
        %p480 = pneg %p479
      $region70: #{stage_forward.1} parent=5 // pred_check_branch
        %482 = sbr.rel (%p480) target = $region72
      $region71: #{stage_forward.1} parent=5 // pred_region
        // Predicated region
        $region73: #{stage_forward.1} parent=71 // pred_check
          %p483 = pneg %p44
        $region74: #{stage_forward.1} parent=71 // pred_check_branch
          %485 = sbr.rel (%p483) target = $region76
        $region75: #{stage_forward.1} parent=71 // pred_region
          %s486 = smul.u32 3, %s24
          %p487 = scmp.lt.s32.totalorder %s486, 5
          %s488 = scalar_select %p487, %s486, 5
          %s489 = smul.addr %s488, 8
          %s490 = scalar_lea.vmem %s0, %s489
          %s491 = smul.u32 3, %s24
        $region76: #{stage_forward.1} parent=71 // pred_fallthru
          _
      $region72: #{stage_forward.1} parent=5 // pred_fallthru
        _
      %p492 = scmp.le.s32.totalorder 1, %s24
      %p493 = scmp.lt.s32.totalorder %s24, 3
      %p494 = pnand %p492, %p493
      %p495 = pneg %p494
      // Predicated region
      $region77: #{stage_forward.1} parent=5 // pred_check
        _
      $region78: #{stage_forward.1} parent=5 // pred_check_branch
        %497 = sbr.rel (%p494) target = $region80
      $region79: #{stage_forward.1} parent=5 // pred_region
        %s498 = ssub.s32 %s24, 1
        %s499 = smul.u32 3, %s29
        %p500 = scmp.lt.s32.totalorder %s499, 5
        %s501 = scalar_select %p500, %s499, 5
        %s502 = smul.addr %s501, 8
        %s503 = scalar_lea.vmem %s0, %s502
        %p504 = pneg %p50
        %p505 = pneg %p47
        %p506 = pneg %p71
        %p507 = pneg %p68
        %p508 = pneg %p92
        %p509 = pneg %p89
        %p510 = pneg %p113
        %p511 = pneg %p110
        %p512 = pneg %p134
        %p513 = pneg %p131
        %p514 = pneg %p155
        %p515 = pneg %p152
        %p516 = pneg %p176
        %p517 = pneg %p173
        %p518 = pneg %p197
        %p519 = pneg %p194
        %p520 = pneg %p218
        %p521 = pneg %p215
        %p522 = pneg %p239
        %p523 = pneg %p236
        %p524 = pneg %p260
        %p525 = pneg %p257
        %p526 = pneg %p281
        %p527 = pneg %p278
        %p528 = pneg %p302
        %p529 = pneg %p299
        %p530 = pneg %p323
        %p531 = pneg %p320
        %p532 = pneg %p344
        %p533 = pneg %p341
        %p534 = pneg %p370
        %p535 = pneg %p367
        %s536 = sand.u32 %s357, 1
        %s537 = sand.u32 %s357, 1
        %s538 = smul.addr %s537, 16
        %s539 = scalar_lea.vmem [#allocation2], %s538
        %p540 = pneg %p396
        %p541 = pneg %p393
        %s542 = sand.u32 %s383, 1
        %s543 = sand.u32 %s383, 1
        %s544 = smul.addr %s543, 16
        %s545 = scalar_lea.vmem [#allocation3], %s544
        %p546 = pneg %p422
        %p547 = pneg %p419
        %s548 = sand.u32 %s409, 1
        %s549 = sand.u32 %s409, 1
        %s550 = smul.addr %s549, 16
        %s551 = scalar_lea.vmem [#allocation4], %s550
        %s552 = smul.u32 3, %s29
        %p553 = scmp.lt.s32.totalorder %s552, 5
        %s554 = scalar_select %p553, %s552, 5
        %s555 = smul.addr %s554, 8
        %s556 = scalar_lea.vmem %s0, %s555
        %s557 = smul.u32 3, %s29
        %v559 = vld [vmem:[%s556] sm:$0xff]
        %v560 = vld [vmem:[%s556 + $0x8] sm:$0xff]
        %v561 = vld [vmem:[%s556 + $0x10] sm:$0xff]
        %v562 = vld [vmem:[%s1] sm:$0xf]
        %v563 = vld [vmem:[%s1 + $0x4] sm:$0xf]
        %v564 = vld [vmem:[%s1 + $0x8] sm:$0xf]
        %v565 = vld [vmem:[%s1 + $0xc] sm:$0xf]
        %v566 = vld [vmem:[%s1 + $0x10] sm:$0xf]
        %v567 = vld [vmem:[%s1 + $0x14] sm:$0xf]
        %v568 = vld [vmem:[%s1 + $0x18] sm:$0xf]
        %v569 = vld [vmem:[%s1 + $0x1c] sm:$0xf]
        %v570 = vld [vmem:[%s1 + $0x20] sm:$0xf]
        %v571 = vld [vmem:[%s1 + $0x24] sm:$0xf]
        %v572 = vld [vmem:[%s1 + $0x28] sm:$0xf]
        %v573 = vld [vmem:[%s1 + $0x2c] sm:$0xf]
        %v574 = vld [vmem:[%s1 + $0x30] sm:$0xf]
        %v575 = vld [vmem:[%s1 + $0x34] sm:$0xf]
        %v576 = vld [vmem:[%s1 + $0x38] sm:$0xf]
        %v577 = vld [vmem:[%s1 + $0x3c] sm:$0xf]
        %v578 = vld [vmem:[%s1 + $0x40] sm:$0xf]
        %v579 = vld [vmem:[%s1 + $0x44] sm:$0xf]
        %v580 = vld [vmem:[%s1 + $0x48] sm:$0xf]
        %v581 = vld [vmem:[%s1 + $0x4c] sm:$0xf]
        %v582 = vld [vmem:[%s1 + $0x50] sm:$0xf]
        %v583 = vld [vmem:[%s1 + $0x54] sm:$0xf]
        %v584 = vld [vmem:[%s1 + $0x58] sm:$0xf]
        %v585 = vld [vmem:[%s1 + $0x5c] sm:$0xf]
        %v586 = vld [vmem:[%s1 + $0x60] sm:$0xf]
        %v587 = vld [vmem:[%s1 + $0x64] sm:$0xf]
        %v588 = vld [vmem:[%s1 + $0x68] sm:$0xf]
        %v589 = vld [vmem:[%s1 + $0x6c] sm:$0xf]
        %v590 = vld [vmem:[%s1 + $0x70] sm:$0xf]
        %v591 = vld [vmem:[%s1 + $0x74] sm:$0xf]
        %v592 = vld [vmem:[%s1 + $0x78] sm:$0xf]
        %v593 = vld [vmem:[%s1 + $0x7c] sm:$0xf]
        %v594 = vld [vmem:[%s1 + $0x80] sm:$0xf]
        %v595 = vld [vmem:[%s1 + $0x84] sm:$0xf]
        %v596 = vld [vmem:[%s1 + $0x88] sm:$0xf]
        %v597 = vld [vmem:[%s1 + $0x8c] sm:$0xf]
        %v598 = vld [vmem:[%s1 + $0x90] sm:$0xf]
        %v599 = vld [vmem:[%s1 + $0x94] sm:$0xf]
        %v600 = vld [vmem:[%s1 + $0x98] sm:$0xf]
        %v601 = vld [vmem:[%s1 + $0x9c] sm:$0xf]
        %v602 = vld [vmem:[%s1 + $0xa0] sm:$0xf]
        %v603 = vld [vmem:[%s1 + $0xa4] sm:$0xf]
        %v604 = vld [vmem:[%s1 + $0xa8] sm:$0xf]
        %v605 = vld [vmem:[%s1 + $0xac] sm:$0xf]
        %v606 = vld [vmem:[%s1 + $0xb0] sm:$0xf]
        %v607 = vld [vmem:[%s1 + $0xb4] sm:$0xf]
        %v608 = vld [vmem:[%s1 + $0xb8] sm:$0xf]
        %v609 = vld [vmem:[%s1 + $0xbc] sm:$0xf]
        %v610 = vld [vmem:[%s2] sm:$0x1]
        %v611 = vld [vmem:[%s3] sm:$0xf]
        %v612 = vld [vmem:[%s3 + $0x4] sm:$0xf]
        %v613 = vld [vmem:[%s4] sm:$0xff]
        %v614 = vld [vmem:[%s4 + $0x8] sm:$0xff]
        %v615 = vld [vmem:[%s5] sm:$0xff]
        %v616 = vld [vmem:[%s5 + $0x8] sm:$0xff]
        %v617 = vld [vmem:[%s6] sm:$0xff]
        %v618 = vld [vmem:[%s6 + $0x8] sm:$0xff]
        %619 = vrot.lane.b32.xlu0 %v559, 19
        %v620 = vpop.permute.xlu0 %619
        %621 = vrot.lane.b32.xlu0 %v560, 19
        %v622 = vpop.permute.xlu0 %621
        %623 = vrot.lane.b32.xlu0 %v561, 19
        %v624 = vpop.permute.xlu0 %623
        %v625 = vlaneseq
        %v626 = vand.u32 %v625, 127
        %vm627 = vcmp.lt.s32.totalorder %v626, 19
        %v628 = vsel %vm627, %v622, %v624
        %v629 = vsel %vm627, %v620, %v622
        %v630 = vsel %vm627, %v624, %v620
        %631 = vrot.lane.b32.xlu0 %v559, 18
        %v632 = vpop.permute.xlu0 %631
        %633 = vrot.lane.b32.xlu0 %v560, 18
        %v634 = vpop.permute.xlu0 %633
        %635 = vrot.lane.b32.xlu0 %v561, 18
        %v636 = vpop.permute.xlu0 %635
        %vm637 = vcmp.lt.s32.totalorder %v626, 18
        %v638 = vsel %vm637, %v634, %v636
        %v639 = vsel %vm637, %v632, %v634
        %v640 = vsel %vm637, %v636, %v632
        %641 = vrot.lane.b32.xlu0 %v559, 17
        %v642 = vpop.permute.xlu0 %641
        %643 = vrot.lane.b32.xlu0 %v560, 17
        %v644 = vpop.permute.xlu0 %643
        %645 = vrot.lane.b32.xlu0 %v561, 17
        %v646 = vpop.permute.xlu0 %645
        %vm647 = vcmp.lt.s32.totalorder %v626, 17
        %v648 = vsel %vm647, %v644, %v646
        %v649 = vsel %vm647, %v642, %v644
        %v650 = vsel %vm647, %v646, %v642
        %651 = vrot.lane.b32.xlu0 %v559, 1
        %v652 = vpop.permute.xlu0 %651
        %653 = vrot.lane.b32.xlu0 %v560, 1
        %v654 = vpop.permute.xlu0 %653
        %655 = vrot.lane.b32.xlu0 %v561, 1
        %v656 = vpop.permute.xlu0 %655
        %vm657 = vcmp.lt.s32.totalorder %v626, 1
        %v658 = vsel %vm657, %v654, %v656
        %v659 = vsel %vm657, %v652, %v654
        %v660 = vsel %vm657, %v656, %v652
        %661 = vrot.lane.b32.xlu0 %v559, 127
        %v662 = vpop.permute.xlu0 %661
        %663 = vrot.lane.b32.xlu0 %v560, 127
        %v664 = vpop.permute.xlu0 %663
        %665 = vrot.lane.b32.xlu0 %v561, 127
        %v666 = vpop.permute.xlu0 %665
        %vm667 = vcmp.lt.s32.totalorder %v626, 127
        %v668 = vsel %vm667, %v664, %v666
        %v669 = vsel %vm667, %v662, %v664
        %v670 = vsel %vm667, %v666, %v662
        %671 = vrot.lane.b32.xlu0 %v559, 111
        %v672 = vpop.permute.xlu0 %671
        %673 = vrot.lane.b32.xlu0 %v560, 111
        %v674 = vpop.permute.xlu0 %673
        %675 = vrot.lane.b32.xlu0 %v561, 111
        %v676 = vpop.permute.xlu0 %675
        %vm677 = vcmp.lt.s32.totalorder %v626, 111
        %v678 = vsel %vm677, %v674, %v676
        %v679 = vsel %vm677, %v672, %v674
        %v680 = vsel %vm677, %v676, %v672
        %681 = vrot.lane.b32.xlu0 %v559, 110
        %v682 = vpop.permute.xlu0 %681
        %683 = vrot.lane.b32.xlu0 %v560, 110
        %v684 = vpop.permute.xlu0 %683
        %685 = vrot.lane.b32.xlu0 %v561, 110
        %v686 = vpop.permute.xlu0 %685
        %vm687 = vcmp.lt.s32.totalorder %v626, 110
        %v688 = vsel %vm687, %v684, %v686
        %v689 = vsel %vm687, %v682, %v684
        %v690 = vsel %vm687, %v686, %v682
        %691 = vrot.lane.b32.xlu0 %v559, 109
        %v692 = vpop.permute.xlu0 %691
        %693 = vrot.lane.b32.xlu0 %v560, 109
        %v694 = vpop.permute.xlu0 %693
        %695 = vrot.lane.b32.xlu0 %v561, 109
        %v696 = vpop.permute.xlu0 %695
        %vm697 = vcmp.lt.s32.totalorder %v626, 109
        %v698 = vsel %vm697, %v694, %v696
        %v699 = vsel %vm697, %v692, %v694
        %v700 = vsel %vm697, %v696, %v692
        %v701 = vpack.c.bf16 %v640, %v630
        %v702 = vpack.c.bf16 %v639, %v629
        %v703 = vpack.c.bf16 %v638, %v628
        %v704 = vpack.c.bf16 %v660, %v650
        %v705 = vpack.c.bf16 %v659, %v649
        %v706 = vpack.c.bf16 %v658, %v648
        %v707 = vpack.c.bf16 %v669, %v559
        %v708 = vpack.c.bf16 %v668, %v560
        %v709 = vpack.c.bf16 %v670, %v561
        %v710 = vpack.c.bf16 %v689, %v679
        %v711 = vpack.c.bf16 %v688, %v678
        %v712 = vpack.c.bf16 %v690, %v680
        %v713 = vpack.c.bf16 %v699, %v699
        %v714 = vpack.c.bf16 %v698, %v698
        %v715 = vpack.c.bf16 %v700, %v700
        %717 = vset.pattern.permute.xlu0 0
        %718 = vperm.xlu0 %717, %v613
        %v719 = vpop.permute.xlu0 %718
        %722 = vset.pattern.permute.xlu0 0
        %723 = vperm.xlu0 %722, %v614
        %v724 = vpop.permute.xlu0 %723
        %v728 = vunpack.c.l.b16 %v611
        %v729 = vunpack.c.l.b16 %v612
        %v730 = vpack.c.b16 %v729, %v728
        %vm731 = vcmask 588800
        %v733 = vsel %vm731, %v730, 0
        %vm735 = vcmask 1043456
        %v737 = vsel %vm735, %v713, 0
        %v740 = vsel %vm735, %v714, 0
        %v743 = vsel %vm735, %v715, 0
        %745 = vmatprep.subr.bf16.mxu0 %v702
        %746 = vmatpush1.bf16.msra.mxu0 %v701
        %747 = vmatprep.subr.bf16.mxu0 %v705
        %748 = vmatpush1.bf16.msra.mxu0 %v704
        %749 = vmatprep.subr.bf16.mxu0 %v708
        %750 = vmatpush1.bf16.msra.mxu0 %v707
        %751 = vmatprep.subr.bf16.mxu0 %v711
        %752 = vmatpush1.bf16.msra.mxu0 %v710
        %753 = vmatprep.subr.bf16.mxu0 %v740
        %754 = vmatpush1.bf16.msra.mxu0 %v737
        %755 = vmatprep.subr.bf16.mxu0 0
        %756 = vmatpush1.bf16.msra.mxu0 0
        %757 = vmatprep.subr.bf16.mxu0 0
        %758 = vmatpush1.bf16.msra.mxu0 0
        %759 = vmatprep.subr.bf16.mxu0 0
        %760 = vmatpush1.bf16.msra.mxu0 0
        %761 = vmatprep.subr.bf16.mxu0 0
        %762 = vmatpush1.bf16.msra.mxu0 0
        %763 = vmatprep.subr.bf16.mxu0 0
        %764 = vmatpush1.bf16.msra.mxu0 0
        %765 = vmatprep.subr.bf16.mxu0 0
        %766 = vmatpush1.bf16.msra.mxu0 0
        %767 = vmatprep.subr.bf16.mxu0 0
        %768 = vmatpush1.bf16.msra.mxu0 0
        %769 = vmatprep.subr.bf16.mxu0 0
        %770 = vmatpush1.bf16.msra.mxu0 0
        %771 = vmatprep.subr.bf16.mxu0 0
        %772 = vmatpush1.bf16.msra.mxu0 0
        %773 = vmatprep.subr.bf16.mxu0 0
        %774 = vmatpush1.bf16.msra.mxu0 0
        %775 = vmatprep.subr.bf16.mxu0 0
        %776 = vmatpush1.bf16.msra.mxu0 0
        %777 = vmatprep.mubr.bf16.mxu0 0
        %778 = vmatmul.mubr.bf16.gmra.mrb[0].mxu0 %v733
        %v779 = vpop.f32.mrb[0].mxu0
        %v780 = vadd.f32 %v719, %v779
        %v781 = vpop.f32.mrb[0].mxu0
        %v782 = vadd.f32 %v719, %v781
        %v783 = vpop.f32.mrb[0].mxu0
        %v784 = vadd.f32 %v724, %v783
        %v785 = vpop.f32.mrb[0].mxu0
        %v786 = vadd.f32 %v724, %v785
        %787 = vdwg.mxu0
        %788 = vmatprep.subr.bf16.mxu0 0
        %789 = vmatpush1.bf16.msra.mxu0 %v703
        %790 = vmatprep.subr.bf16.mxu0 0
        %791 = vmatpush1.bf16.msra.mxu0 %v706
        %792 = vmatprep.subr.bf16.mxu0 0
        %793 = vmatpush1.bf16.msra.mxu0 %v709
        %794 = vmatprep.subr.bf16.mxu0 0
        %795 = vmatpush1.bf16.msra.mxu0 %v712
        %796 = vmatprep.subr.bf16.mxu0 0
        %797 = vmatpush1.bf16.msra.mxu0 %v743
        %798 = vmatprep.subr.bf16.mxu0 0
        %799 = vmatpush1.bf16.msra.mxu0 0
        %800 = vmatprep.subr.bf16.mxu0 0
        %801 = vmatpush1.bf16.msra.mxu0 0
        %802 = vmatprep.subr.bf16.mxu0 0
        %803 = vmatpush1.bf16.msra.mxu0 0
        %804 = vmatprep.subr.bf16.mxu0 0
        %805 = vmatpush1.bf16.msra.mxu0 0
        %806 = vmatprep.subr.bf16.mxu0 0
        %807 = vmatpush1.bf16.msra.mxu0 0
        %808 = vmatprep.subr.bf16.mxu0 0
        %809 = vmatpush1.bf16.msra.mxu0 0
        %810 = vmatprep.subr.bf16.mxu0 0
        %811 = vmatpush1.bf16.msra.mxu0 0
        %812 = vmatprep.subr.bf16.mxu0 0
        %813 = vmatpush1.bf16.msra.mxu0 0
        %814 = vmatprep.subr.bf16.mxu0 0
        %815 = vmatpush1.bf16.msra.mxu0 0
        %816 = vmatprep.subr.bf16.mxu0 0
        %817 = vmatpush1.bf16.msra.mxu0 0
        %818 = vmatprep.subr.bf16.mxu0 0
        %819 = vmatpush1.bf16.msra.mxu0 0
        %820 = vmatprep.mubr.bf16.mxu0 0
        %821 = vmatmul.mubr.bf16.gmra.mrb[0].mxu0 %v733
        %v822 = vpop.f32.mrb[0].mxu0
        %v823 = vadd.f32 %v719, %v822
        %v824 = vpop.f32.mrb[0].mxu0
        %v825 = vpop.f32.mrb[0].mxu0
        %v826 = vadd.f32 %v724, %v825
        %v827 = vpop.f32.mrb[0].mxu0
        %828 = vdwg.mxu0
        %v829 = vmax.f32 %v780, 0.0
        %v830 = vmax.f32 %v782, 0.0
        %v831 = vmax.f32 %v823, 0.0
        %v832 = vmax.f32 %v784, 0.0
        %v833 = vmax.f32 %v786, 0.0
        %v834 = vmax.f32 %v826, 0.0
        %v835 = vpack.c.bf16 %v832, %v829
        %v836 = vpack.c.bf16 %v833, %v830
        %v837 = vpack.c.bf16 %v834, %v831
        %v838 = vpack.c.bf16 %v559, %v559
        %v839 = vpack.c.bf16 %v560, %v560
        %v840 = vpack.c.bf16 %v561, %v561
        %v889 = vunpack.c.l.b16 %v562
        %v890 = vunpack.c.l.b16 %v563
        %v891 = vunpack.c.l.b16 %v564
        %v892 = vunpack.c.l.b16 %v565
        %v893 = vunpack.c.l.b16 %v566
        %v894 = vunpack.c.l.b16 %v567
        %v895 = vunpack.c.l.b16 %v568
        %v896 = vunpack.c.l.b16 %v569
        %v897 = vunpack.c.l.b16 %v570
        %v898 = vunpack.c.l.b16 %v571
        %v899 = vunpack.c.l.b16 %v572
        %v900 = vunpack.c.l.b16 %v573
        %v901 = vunpack.c.l.b16 %v574
        %v902 = vunpack.c.l.b16 %v575
        %v903 = vunpack.c.l.b16 %v576
        %v904 = vunpack.c.l.b16 %v577
        %v905 = vunpack.c.l.b16 %v578
        %v906 = vunpack.c.l.b16 %v579
        %v907 = vunpack.c.l.b16 %v580
        %v908 = vunpack.c.l.b16 %v581
        %v909 = vunpack.c.l.b16 %v582
        %v910 = vunpack.c.l.b16 %v583
        %v911 = vunpack.c.l.b16 %v584
        %v912 = vunpack.c.l.b16 %v585
        %v913 = vunpack.c.l.b16 %v586
        %v914 = vunpack.c.l.b16 %v587
        %v915 = vunpack.c.l.b16 %v588
        %v916 = vunpack.c.l.b16 %v589
        %v917 = vunpack.c.l.b16 %v590
        %v918 = vunpack.c.l.b16 %v591
        %v919 = vunpack.c.l.b16 %v592
        %v920 = vunpack.c.l.b16 %v593
        %v921 = vunpack.c.l.b16 %v594
        %v922 = vunpack.c.l.b16 %v595
        %v923 = vunpack.c.l.b16 %v596
        %v924 = vunpack.c.l.b16 %v597
        %v925 = vunpack.c.l.b16 %v598
        %v926 = vunpack.c.l.b16 %v599
        %v927 = vunpack.c.l.b16 %v600
        %v928 = vunpack.c.l.b16 %v601
        %v929 = vunpack.c.l.b16 %v602
        %v930 = vunpack.c.l.b16 %v603
        %v931 = vunpack.c.l.b16 %v604
        %v932 = vunpack.c.l.b16 %v605
        %v933 = vunpack.c.l.b16 %v606
        %v934 = vunpack.c.l.b16 %v607
        %v935 = vunpack.c.l.b16 %v608
        %v936 = vunpack.c.l.b16 %v609
        %v937 = vpack.c.b16 %v890, %v889
        %v938 = vpack.c.b16 %v892, %v891
        %v939 = vpack.c.b16 %v894, %v893
        %v940 = vpack.c.b16 %v896, %v895
        %v941 = vpack.c.b16 %v898, %v897
        %v942 = vpack.c.b16 %v900, %v899
        %v943 = vpack.c.b16 %v902, %v901
        %v944 = vpack.c.b16 %v904, %v903
        %v945 = vpack.c.b16 %v906, %v905
        %v946 = vpack.c.b16 %v908, %v907
        %v947 = vpack.c.b16 %v910, %v909
        %v948 = vpack.c.b16 %v912, %v911
        %v949 = vpack.c.b16 %v914, %v913
        %v950 = vpack.c.b16 %v916, %v915
        %v951 = vpack.c.b16 %v918, %v917
        %v952 = vpack.c.b16 %v920, %v919
        %v953 = vpack.c.b16 %v922, %v921
        %v954 = vpack.c.b16 %v924, %v923
        %v955 = vpack.c.b16 %v926, %v925
        %v956 = vpack.c.b16 %v928, %v927
        %v957 = vpack.c.b16 %v930, %v929
        %v958 = vpack.c.b16 %v932, %v931
        %v959 = vpack.c.b16 %v934, %v933
        %v960 = vpack.c.b16 %v936, %v935
        %985 = vmatprep.subr.bf16.mxu0 0
        %986 = vmatpush1.bf16.msra.mxu0 %v937
        %987 = vmatprep.subr.bf16.mxu0 0
        %988 = vmatpush1.bf16.msra.mxu0 %v938
        %989 = vmatprep.subr.bf16.mxu0 0
        %990 = vmatpush1.bf16.msra.mxu0 %v939
        %991 = vmatprep.subr.bf16.mxu0 0
        %992 = vmatpush1.bf16.msra.mxu0 %v940
        %993 = vmatprep.subr.bf16.mxu0 0
        %994 = vmatpush1.bf16.msra.mxu0 %v941
        %995 = vmatprep.subr.bf16.mxu0 0
        %996 = vmatpush1.bf16.msra.mxu0 %v942
        %997 = vmatprep.subr.bf16.mxu0 0
        %998 = vmatpush1.bf16.msra.mxu0 %v943
        %999 = vmatprep.subr.bf16.mxu0 0
        %1000 = vmatpush1.bf16.msra.mxu0 %v944
        %1001 = vmatprep.subr.bf16.mxu0 0
        %1002 = vmatpush1.bf16.msra.mxu0 %v945
        %1003 = vmatprep.subr.bf16.mxu0 0
        %1004 = vmatpush1.bf16.msra.mxu0 %v946
        %1005 = vmatprep.subr.bf16.mxu0 0
        %1006 = vmatpush1.bf16.msra.mxu0 %v947
        %1007 = vmatprep.subr.bf16.mxu0 0
        %1008 = vmatpush1.bf16.msra.mxu0 %v948
        %1009 = vmatprep.subr.bf16.mxu0 0
        %1010 = vmatpush1.bf16.msra.mxu0 %v949
        %1011 = vmatprep.subr.bf16.mxu0 0
        %1012 = vmatpush1.bf16.msra.mxu0 %v950
        %1013 = vmatprep.subr.bf16.mxu0 0
        %1014 = vmatpush1.bf16.msra.mxu0 %v951
        %1015 = vmatprep.subr.bf16.mxu0 0
        %1016 = vmatpush1.bf16.msra.mxu0 %v952
        %1017 = vmatprep.mubr.bf16.mxu0 %v836
        %1018 = vmatmul.mubr.bf16.gmra.mrb[0].mxu0 %v835
        %v1019 = vpop.f32.mrb[0].mxu0
        %v1020 = vadd.f32 0.0, %v1019
        %v1021 = vpop.f32.mrb[0].mxu0
        %v1022 = vpop.f32.mrb[0].mxu0
        %v1023 = vadd.f32 0.0, %v1022
        %v1024 = vpop.f32.mrb[0].mxu0
        %1025 = vmatprep.mubr.bf16.mxu0 %v839
        %1026 = vmatmul.mubr.bf16.gmra.mrb[0].mxu0 %v838
        %v1027 = vpop.f32.mrb[0].mxu0
        %v1028 = vadd.f32 0.0, %v1027
        %v1029 = vpop.f32.mrb[0].mxu0
        %v1030 = vpop.f32.mrb[0].mxu0
        %v1031 = vpop.f32.mrb[0].mxu0
        %1032 = vdwg.mxu0
        %1033 = vmatprep.subr.bf16.mxu0 0
        %1034 = vmatpush1.bf16.msra.mxu0 %v953
        %1035 = vmatprep.subr.bf16.mxu0 0
        %1036 = vmatpush1.bf16.msra.mxu0 %v954
        %1037 = vmatprep.subr.bf16.mxu0 0
        %1038 = vmatpush1.bf16.msra.mxu0 %v955
        %1039 = vmatprep.subr.bf16.mxu0 0
        %1040 = vmatpush1.bf16.msra.mxu0 %v956
        %1041 = vmatprep.subr.bf16.mxu0 0
        %1042 = vmatpush1.bf16.msra.mxu0 %v957
        %1043 = vmatprep.subr.bf16.mxu0 0
        %1044 = vmatpush1.bf16.msra.mxu0 %v958
        %1045 = vmatprep.subr.bf16.mxu0 0
        %1046 = vmatpush1.bf16.msra.mxu0 %v959
        %1047 = vmatprep.subr.bf16.mxu0 0
        %1048 = vmatpush1.bf16.msra.mxu0 %v960
        %1049 = vmatprep.subr.bf16.mxu0 0
        %1050 = vmatpush1.bf16.msra.mxu0 0
        %1051 = vmatprep.subr.bf16.mxu0 0
        %1052 = vmatpush1.bf16.msra.mxu0 0
        %1053 = vmatprep.subr.bf16.mxu0 0
        %1054 = vmatpush1.bf16.msra.mxu0 0
        %1055 = vmatprep.subr.bf16.mxu0 0
        %1056 = vmatpush1.bf16.msra.mxu0 0
        %1057 = vmatprep.subr.bf16.mxu0 0
        %1058 = vmatpush1.bf16.msra.mxu0 0
        %1059 = vmatprep.subr.bf16.mxu0 0
        %1060 = vmatpush1.bf16.msra.mxu0 0
        %1061 = vmatprep.subr.bf16.mxu0 0
        %1062 = vmatpush1.bf16.msra.mxu0 0
        %1063 = vmatprep.subr.bf16.mxu0 0
        %1064 = vmatpush1.bf16.msra.mxu0 0
        %1065 = vmatprep.mubr.bf16.mxu0 0
        %1066 = vmatmul.mubr.bf16.gmra.mrb[0].mxu0 %v837
        %v1067 = vpop.f32.mrb[0].mxu0
        %v1068 = vadd.f32 %v1020, %v1067
        %v1069 = vpop.f32.mrb[0].mxu0
        %v1070 = vpop.f32.mrb[0].mxu0
        %v1071 = vadd.f32 %v1023, %v1070
        %v1072 = vpop.f32.mrb[0].mxu0
        %1073 = vmatprep.mubr.bf16.mxu0 0
        %1074 = vmatmul.mubr.bf16.gmra.mrb[0].mxu0 %v840
        %v1075 = vpop.f32.mrb[0].mxu0
        %v1076 = vadd.f32 %v1028, %v1075
        %v1077 = vpop.f32.mrb[0].mxu0
        %v1078 = vpop.f32.mrb[0].mxu0
        %v1079 = vpop.f32.mrb[0].mxu0
        %1080 = vdwg.mxu0
        %1081 = vrot.lane.b32.xlu0 %v1068, 11
        %v1082 = vpop.permute.xlu0 %1081
        %1083 = vrot.lane.b32.xlu0 %v1071, 11
        %v1084 = vpop.permute.xlu0 %1083
        %1085 = vrot.lane.b32.xlu0 %v1068, 10
        %v1086 = vpop.permute.xlu0 %1085
        %1087 = vrot.lane.b32.xlu0 %v1071, 10
        %v1088 = vpop.permute.xlu0 %1087
        %1089 = vrot.lane.b32.xlu0 %v1068, 9
        %v1090 = vpop.permute.xlu0 %1089
        %1091 = vrot.lane.b32.xlu0 %v1071, 9
        %v1092 = vpop.permute.xlu0 %1091
        %1093 = vrot.lane.b32.xlu0 %v1068, 1
        %v1094 = vpop.permute.xlu0 %1093
        %1095 = vrot.lane.b32.xlu0 %v1071, 1
        %v1096 = vpop.permute.xlu0 %1095
        %1097 = vrot.lane.b32.xlu0 %v1068, 127
        %v1098 = vpop.permute.xlu0 %1097
        %1099 = vrot.lane.b32.xlu0 %v1071, 127
        %v1100 = vpop.permute.xlu0 %1099
        %1101 = vrot.lane.b32.xlu0 %v1068, 119
        %v1102 = vpop.permute.xlu0 %1101
        %1103 = vrot.lane.b32.xlu0 %v1071, 119
        %v1104 = vpop.permute.xlu0 %1103
        %1105 = vrot.lane.b32.xlu0 %v1068, 118
        %v1106 = vpop.permute.xlu0 %1105
        %1107 = vrot.lane.b32.xlu0 %v1071, 118
        %v1108 = vpop.permute.xlu0 %1107
        %1109 = vrot.lane.b32.xlu0 %v1068, 117
        %v1110 = vpop.permute.xlu0 %1109
        %1111 = vrot.lane.b32.xlu0 %v1071, 117
        %v1112 = vpop.permute.xlu0 %1111
        %v1113 = vpack.c.bf16 %v1084, %v1082
        %v1114 = vpack.c.bf16 %v1088, %v1086
        %v1115 = vpack.c.bf16 %v1092, %v1090
        %v1116 = vpack.c.bf16 %v1096, %v1094
        %v1117 = vpack.c.bf16 %v1071, %v1068
        %v1118 = vpack.c.bf16 %v1100, %v1098
        %v1119 = vpack.c.bf16 %v1104, %v1102
        %v1120 = vpack.c.bf16 %v1108, %v1106
        %v1121 = vpack.c.bf16 %v1112, %v1110
        %1123 = vset.pattern.permute.xlu0 0
        %1124 = vperm.xlu0 %1123, %v617
        %v1125 = vpop.permute.xlu0 %1124
        %1128 = vset.pattern.permute.xlu0 0
        %1129 = vperm.xlu0 %1128, %v618
        %v1130 = vpop.permute.xlu0 %1129
        %v1134 = vunpack.c.l.b16 %v615
        %v1135 = vunpack.c.h.b16 %v615
        %v1136 = vunpack.c.l.b16 %v616
        %v1137 = vunpack.c.h.b16 %v616
        %v1138 = vpack.c.b16 %v1136, %v1134
        %v1139 = vpack.c.b16 %v1137, %v1135
        %vm1141 = vcmask 130048
        %v1143 = vsel %vm1141, %v1139, 0
        %1145 = vmatprep.subr.bf16.mxu0 0
        %1146 = vmatpush1.bf16.msra.mxu0 %v1113
        %1147 = vmatprep.subr.bf16.mxu0 0
        %1148 = vmatpush1.bf16.msra.mxu0 %v1114
        %1149 = vmatprep.subr.bf16.mxu0 0
        %1150 = vmatpush1.bf16.msra.mxu0 %v1115
        %1151 = vmatprep.subr.bf16.mxu0 0
        %1152 = vmatpush1.bf16.msra.mxu0 %v1116
        %1153 = vmatprep.subr.bf16.mxu0 0
        %1154 = vmatpush1.bf16.msra.mxu0 %v1117
        %1155 = vmatprep.subr.bf16.mxu0 0
        %1156 = vmatpush1.bf16.msra.mxu0 %v1118
        %1157 = vmatprep.subr.bf16.mxu0 0
        %1158 = vmatpush1.bf16.msra.mxu0 %v1119
        %1159 = vmatprep.subr.bf16.mxu0 0
        %1160 = vmatpush1.bf16.msra.mxu0 %v1120
        %1161 = vmatprep.subr.bf16.mxu0 0
        %1162 = vmatpush1.bf16.msra.mxu0 %v1121
        %1163 = vmatprep.subr.bf16.mxu0 0
        %1164 = vmatpush1.bf16.msra.mxu0 0
        %1165 = vmatprep.subr.bf16.mxu0 0
        %1166 = vmatpush1.bf16.msra.mxu0 0
        %1167 = vmatprep.subr.bf16.mxu0 0
        %1168 = vmatpush1.bf16.msra.mxu0 0
        %1169 = vmatprep.subr.bf16.mxu0 0
        %1170 = vmatpush1.bf16.msra.mxu0 0
        %1171 = vmatprep.subr.bf16.mxu0 0
        %1172 = vmatpush1.bf16.msra.mxu0 0
        %1173 = vmatprep.subr.bf16.mxu0 0
        %1174 = vmatpush1.bf16.msra.mxu0 0
        %1175 = vmatprep.subr.bf16.mxu0 0
        %1176 = vmatpush1.bf16.msra.mxu0 0
        %1177 = vmatprep.mubr.bf16.mxu0 %v1143
        %1178 = vmatmul.mubr.bf16.gmra.mrb[0].mxu0 %v1138
        %v1179 = vpop.f32.mrb[0].mxu0
        %v1180 = vadd.f32 %v1125, %v1179
        %v1181 = vpop.f32.mrb[0].mxu0
        %v1182 = vpop.f32.mrb[0].mxu0
        %v1183 = vadd.f32 %v1130, %v1182
        %v1184 = vpop.f32.mrb[0].mxu0
        %1185 = vdwg.mxu0
        %v1186 = vadd.f32 %v1180, %v1076
        %v1187 = vadd.f32 %v1183, 0.0
        %v1189 = vlaneseq
        %v1190 = vshrl.u32 %v1189, 7
        %v1191 = vsub.s32 0, %v1190
        %v1192 = vrot.slane %v610, %v1191
        %v1194 = vmul.f32 %v1186, %v1192
        %v1195 = vmul.f32 %v1187, %v1192
        %1196 = vst [vmem:[%s539] sm:$0xff] %v1194
        %1197 = vst [vmem:[%s539 + $0x8] sm:$0xff] %v1195
        %v1198 = vld [vmem:[%s7] sm:$0xff]
        %v1199 = vld [vmem:[%s7 + $0x8] sm:$0xff]
        %v1200 = vld [vmem:[%s8] sm:$0xff]
        %v1201 = vld [vmem:[%s8 + $0x8] sm:$0xff]
        %v1202 = vld [vmem:[%s9] sm:$0xff]
        %v1203 = vld [vmem:[%s9 + $0x8] sm:$0xff]
        %v1204 = vld [vmem:[%s10] sm:$0xff]
        %v1205 = vld [vmem:[%s10 + $0x8] sm:$0xff]
        %1206 = vrot.lane.b32.xlu0 %v1194, 11
        %v1207 = vpop.permute.xlu0 %1206
        %1208 = vrot.lane.b32.xlu0 %v1195, 11
        %v1209 = vpop.permute.xlu0 %1208
        %1210 = vrot.lane.b32.xlu0 %v1194, 10
        %v1211 = vpop.permute.xlu0 %1210
        %1212 = vrot.lane.b32.xlu0 %v1195, 10
        %v1213 = vpop.permute.xlu0 %1212
        %1214 = vrot.lane.b32.xlu0 %v1194, 9
        %v1215 = vpop.permute.xlu0 %1214
        %1216 = vrot.lane.b32.xlu0 %v1195, 9
        %v1217 = vpop.permute.xlu0 %1216
        %1218 = vrot.lane.b32.xlu0 %v1194, 1
        %v1219 = vpop.permute.xlu0 %1218
        %1220 = vrot.lane.b32.xlu0 %v1195, 1
        %v1221 = vpop.permute.xlu0 %1220
        %1222 = vrot.lane.b32.xlu0 %v1194, 127
        %v1223 = vpop.permute.xlu0 %1222
        %1224 = vrot.lane.b32.xlu0 %v1195, 127
        %v1225 = vpop.permute.xlu0 %1224
        %1226 = vrot.lane.b32.xlu0 %v1194, 119
        %v1227 = vpop.permute.xlu0 %1226
        %1228 = vrot.lane.b32.xlu0 %v1195, 119
        %v1229 = vpop.permute.xlu0 %1228
        %1230 = vrot.lane.b32.xlu0 %v1194, 118
        %v1231 = vpop.permute.xlu0 %1230
        %1232 = vrot.lane.b32.xlu0 %v1195, 118
        %v1233 = vpop.permute.xlu0 %1232
        %1234 = vrot.lane.b32.xlu0 %v1194, 117
        %v1235 = vpop.permute.xlu0 %1234
        %1236 = vrot.lane.b32.xlu0 %v1195, 117
        %v1237 = vpop.permute.xlu0 %1236
        %v1238 = vpack.c.bf16 %v1209, %v1207
        %v1239 = vpack.c.bf16 %v1213, %v1211
        %v1240 = vpack.c.bf16 %v1217, %v1215
        %v1241 = vpack.c.bf16 %v1221, %v1219
        %v1242 = vpack.c.bf16 %v1195, %v1194
        %v1243 = vpack.c.bf16 %v1225, %v1223
        %v1244 = vpack.c.bf16 %v1229, %v1227
        %v1245 = vpack.c.bf16 %v1233, %v1231
        %v1246 = vpack.c.bf16 %v1237, %v1235
        %1248 = vset.pattern.permute.xlu0 0
        %1249 = vperm.xlu0 %1248, %v1200
        %v1250 = vpop.permute.xlu0 %1249
        %1253 = vset.pattern.permute.xlu0 0
        %1254 = vperm.xlu0 %1253, %v1201
        %v1255 = vpop.permute.xlu0 %1254
        %v1259 = vunpack.c.l.b16 %v1198
        %v1260 = vunpack.c.h.b16 %v1198
        %v1261 = vunpack.c.l.b16 %v1199
        %v1262 = vunpack.c.h.b16 %v1199
        %v1263 = vpack.c.b16 %v1261, %v1259
        %v1264 = vpack.c.b16 %v1262, %v1260
        %v1267 = vsel %vm1141, %v1264, 0
        %1269 = vmatprep.subr.bf16.mxu0 0
        %1270 = vmatpush1.bf16.msra.mxu0 %v1238
        %1271 = vmatprep.subr.bf16.mxu0 0
        %1272 = vmatpush1.bf16.msra.mxu0 %v1239
        %1273 = vmatprep.subr.bf16.mxu0 0
        %1274 = vmatpush1.bf16.msra.mxu0 %v1240
        %1275 = vmatprep.subr.bf16.mxu0 0
        %1276 = vmatpush1.bf16.msra.mxu0 %v1241
        %1277 = vmatprep.subr.bf16.mxu0 0
        %1278 = vmatpush1.bf16.msra.mxu0 %v1242
        %1279 = vmatprep.subr.bf16.mxu0 0
        %1280 = vmatpush1.bf16.msra.mxu0 %v1243
        %1281 = vmatprep.subr.bf16.mxu0 0
        %1282 = vmatpush1.bf16.msra.mxu0 %v1244
        %1283 = vmatprep.subr.bf16.mxu0 0
        %1284 = vmatpush1.bf16.msra.mxu0 %v1245
        %1285 = vmatprep.subr.bf16.mxu0 0
        %1286 = vmatpush1.bf16.msra.mxu0 %v1246
        %1287 = vmatprep.subr.bf16.mxu0 0
        %1288 = vmatpush1.bf16.msra.mxu0 0
        %1289 = vmatprep.subr.bf16.mxu0 0
        %1290 = vmatpush1.bf16.msra.mxu0 0
        %1291 = vmatprep.subr.bf16.mxu0 0
        %1292 = vmatpush1.bf16.msra.mxu0 0
        %1293 = vmatprep.subr.bf16.mxu0 0
        %1294 = vmatpush1.bf16.msra.mxu0 0
        %1295 = vmatprep.subr.bf16.mxu0 0
        %1296 = vmatpush1.bf16.msra.mxu0 0
        %1297 = vmatprep.subr.bf16.mxu0 0
        %1298 = vmatpush1.bf16.msra.mxu0 0
        %1299 = vmatprep.subr.bf16.mxu0 0
        %1300 = vmatpush1.bf16.msra.mxu0 0
        %1301 = vmatprep.mubr.bf16.mxu0 %v1267
        %1302 = vmatmul.mubr.bf16.gmra.mrb[0].mxu0 %v1263
        %v1303 = vpop.f32.mrb[0].mxu0
        %v1304 = vadd.f32 %v1250, %v1303
        %v1305 = vpop.f32.mrb[0].mxu0
        %v1306 = vpop.f32.mrb[0].mxu0
        %v1307 = vadd.f32 %v1255, %v1306
        %v1308 = vpop.f32.mrb[0].mxu0
        %1309 = vdwg.mxu0
        %v1310 = vmax.f32 %v1304, 0.0
        %v1311 = vmax.f32 %v1307, 0.0
        %v1312 = vmul.f32 %v1310, %v1192
        %v1313 = vmul.f32 %v1311, %v1192
        %1314 = vrot.lane.b32.xlu0 %v1312, 11
        %v1315 = vpop.permute.xlu0 %1314
        %1316 = vrot.lane.b32.xlu0 %v1313, 11
        %v1317 = vpop.permute.xlu0 %1316
        %1318 = vrot.lane.b32.xlu0 %v1312, 10
        %v1319 = vpop.permute.xlu0 %1318
        %1320 = vrot.lane.b32.xlu0 %v1313, 10
        %v1321 = vpop.permute.xlu0 %1320
        %1322 = vrot.lane.b32.xlu0 %v1312, 9
        %v1323 = vpop.permute.xlu0 %1322
        %1324 = vrot.lane.b32.xlu0 %v1313, 9
        %v1325 = vpop.permute.xlu0 %1324
        %1326 = vrot.lane.b32.xlu0 %v1312, 1
        %v1327 = vpop.permute.xlu0 %1326
        %1328 = vrot.lane.b32.xlu0 %v1313, 1
        %v1329 = vpop.permute.xlu0 %1328
        %1330 = vrot.lane.b32.xlu0 %v1312, 127
        %v1331 = vpop.permute.xlu0 %1330
        %1332 = vrot.lane.b32.xlu0 %v1313, 127
        %v1333 = vpop.permute.xlu0 %1332
        %1334 = vrot.lane.b32.xlu0 %v1312, 119
        %v1335 = vpop.permute.xlu0 %1334
        %1336 = vrot.lane.b32.xlu0 %v1313, 119
        %v1337 = vpop.permute.xlu0 %1336
        %1338 = vrot.lane.b32.xlu0 %v1312, 118
        %v1339 = vpop.permute.xlu0 %1338
        %1340 = vrot.lane.b32.xlu0 %v1313, 118
        %v1341 = vpop.permute.xlu0 %1340
        %1342 = vrot.lane.b32.xlu0 %v1312, 117
        %v1343 = vpop.permute.xlu0 %1342
        %1344 = vrot.lane.b32.xlu0 %v1313, 117
        %v1345 = vpop.permute.xlu0 %1344
        %v1346 = vpack.c.bf16 %v1317, %v1315
        %v1347 = vpack.c.bf16 %v1321, %v1319
        %v1348 = vpack.c.bf16 %v1325, %v1323
        %v1349 = vpack.c.bf16 %v1329, %v1327
        %v1350 = vpack.c.bf16 %v1313, %v1312
        %v1351 = vpack.c.bf16 %v1333, %v1331
        %v1352 = vpack.c.bf16 %v1337, %v1335
        %v1353 = vpack.c.bf16 %v1341, %v1339
        %v1354 = vpack.c.bf16 %v1345, %v1343
        %1356 = vset.pattern.permute.xlu0 0
        %1357 = vperm.xlu0 %1356, %v1204
        %v1358 = vpop.permute.xlu0 %1357
        %1361 = vset.pattern.permute.xlu0 0
        %1362 = vperm.xlu0 %1361, %v1205
        %v1363 = vpop.permute.xlu0 %1362
        %v1367 = vunpack.c.l.b16 %v1202
        %v1368 = vunpack.c.h.b16 %v1202
        %v1369 = vunpack.c.l.b16 %v1203
        %v1370 = vunpack.c.h.b16 %v1203
        %v1371 = vpack.c.b16 %v1369, %v1367
        %v1372 = vpack.c.b16 %v1370, %v1368
        %v1375 = vsel %vm1141, %v1372, 0
        %1377 = vmatprep.subr.bf16.mxu0 0
        %1378 = vmatpush1.bf16.msra.mxu0 %v1346
        %1379 = vmatprep.subr.bf16.mxu0 0
        %1380 = vmatpush1.bf16.msra.mxu0 %v1347
        %1381 = vmatprep.subr.bf16.mxu0 0
        %1382 = vmatpush1.bf16.msra.mxu0 %v1348
        %1383 = vmatprep.subr.bf16.mxu0 0
        %1384 = vmatpush1.bf16.msra.mxu0 %v1349
        %1385 = vmatprep.subr.bf16.mxu0 0
        %1386 = vmatpush1.bf16.msra.mxu0 %v1350
        %1387 = vmatprep.subr.bf16.mxu0 0
        %1388 = vmatpush1.bf16.msra.mxu0 %v1351
        %1389 = vmatprep.subr.bf16.mxu0 0
        %1390 = vmatpush1.bf16.msra.mxu0 %v1352
        %1391 = vmatprep.subr.bf16.mxu0 0
        %1392 = vmatpush1.bf16.msra.mxu0 %v1353
        %1393 = vmatprep.subr.bf16.mxu0 0
        %1394 = vmatpush1.bf16.msra.mxu0 %v1354
        %1395 = vmatprep.subr.bf16.mxu0 0
        %1396 = vmatpush1.bf16.msra.mxu0 0
        %1397 = vmatprep.subr.bf16.mxu0 0
        %1398 = vmatpush1.bf16.msra.mxu0 0
        %1399 = vmatprep.subr.bf16.mxu0 0
        %1400 = vmatpush1.bf16.msra.mxu0 0
        %1401 = vmatprep.subr.bf16.mxu0 0
        %1402 = vmatpush1.bf16.msra.mxu0 0
        %1403 = vmatprep.subr.bf16.mxu0 0
        %1404 = vmatpush1.bf16.msra.mxu0 0
        %1405 = vmatprep.subr.bf16.mxu0 0
        %1406 = vmatpush1.bf16.msra.mxu0 0
        %1407 = vmatprep.subr.bf16.mxu0 0
        %1408 = vmatpush1.bf16.msra.mxu0 0
        %1409 = vmatprep.mubr.bf16.mxu0 %v1375
        %1410 = vmatmul.mubr.bf16.gmra.mrb[0].mxu0 %v1371
        %v1411 = vpop.f32.mrb[0].mxu0
        %v1412 = vadd.f32 %v1358, %v1411
        %v1413 = vpop.f32.mrb[0].mxu0
        %v1414 = vpop.f32.mrb[0].mxu0
        %v1415 = vadd.f32 %v1363, %v1414
        %v1416 = vpop.f32.mrb[0].mxu0
        %1417 = vdwg.mxu0
        %v1418 = vadd.f32 %v1412, %v1194
        %v1419 = vadd.f32 %v1415, %v1195
        %v1420 = vmul.f32 %v1418, %v1192
        %v1421 = vmul.f32 %v1419, %v1192
        %1422 = vst [vmem:[%s545] sm:$0xff] %v1420
        %1423 = vst [vmem:[%s545 + $0x8] sm:$0xff] %v1421
        %v1424 = vld [vmem:[%s11] sm:$0xff]
        %v1425 = vld [vmem:[%s11 + $0x8] sm:$0xff]
        %v1426 = vld [vmem:[%s12] sm:$0xff]
        %v1427 = vld [vmem:[%s12 + $0x8] sm:$0xff]
        %v1428 = vld [vmem:[%s13] sm:$0xff]
        %v1429 = vld [vmem:[%s13 + $0x8] sm:$0xff]
        %v1430 = vld [vmem:[%s14] sm:$0xff]
        %v1431 = vld [vmem:[%s14 + $0x8] sm:$0xff]
        %1432 = vrot.lane.b32.xlu0 %v1420, 11
        %v1433 = vpop.permute.xlu0 %1432
        %1434 = vrot.lane.b32.xlu0 %v1421, 11
        %v1435 = vpop.permute.xlu0 %1434
        %1436 = vrot.lane.b32.xlu0 %v1420, 10
        %v1437 = vpop.permute.xlu0 %1436
        %1438 = vrot.lane.b32.xlu0 %v1421, 10
        %v1439 = vpop.permute.xlu0 %1438
        %1440 = vrot.lane.b32.xlu0 %v1420, 9
        %v1441 = vpop.permute.xlu0 %1440
        %1442 = vrot.lane.b32.xlu0 %v1421, 9
        %v1443 = vpop.permute.xlu0 %1442
        %1444 = vrot.lane.b32.xlu0 %v1420, 1
        %v1445 = vpop.permute.xlu0 %1444
        %1446 = vrot.lane.b32.xlu0 %v1421, 1
        %v1447 = vpop.permute.xlu0 %1446
        %1448 = vrot.lane.b32.xlu0 %v1420, 127
        %v1449 = vpop.permute.xlu0 %1448
        %1450 = vrot.lane.b32.xlu0 %v1421, 127
        %v1451 = vpop.permute.xlu0 %1450
        %1452 = vrot.lane.b32.xlu0 %v1420, 119
        %v1453 = vpop.permute.xlu0 %1452
        %1454 = vrot.lane.b32.xlu0 %v1421, 119
        %v1455 = vpop.permute.xlu0 %1454
        %1456 = vrot.lane.b32.xlu0 %v1420, 118
        %v1457 = vpop.permute.xlu0 %1456
        %1458 = vrot.lane.b32.xlu0 %v1421, 118
        %v1459 = vpop.permute.xlu0 %1458
        %1460 = vrot.lane.b32.xlu0 %v1420, 117
        %v1461 = vpop.permute.xlu0 %1460
        %1462 = vrot.lane.b32.xlu0 %v1421, 117
        %v1463 = vpop.permute.xlu0 %1462
        %v1464 = vpack.c.bf16 %v1435, %v1433
        %v1465 = vpack.c.bf16 %v1439, %v1437
        %v1466 = vpack.c.bf16 %v1443, %v1441
        %v1467 = vpack.c.bf16 %v1447, %v1445
        %v1468 = vpack.c.bf16 %v1421, %v1420
        %v1469 = vpack.c.bf16 %v1451, %v1449
        %v1470 = vpack.c.bf16 %v1455, %v1453
        %v1471 = vpack.c.bf16 %v1459, %v1457
        %v1472 = vpack.c.bf16 %v1463, %v1461
        %1474 = vset.pattern.permute.xlu0 0
        %1475 = vperm.xlu0 %1474, %v1426
        %v1476 = vpop.permute.xlu0 %1475
        %1479 = vset.pattern.permute.xlu0 0
        %1480 = vperm.xlu0 %1479, %v1427
        %v1481 = vpop.permute.xlu0 %1480
        %v1485 = vunpack.c.l.b16 %v1424
        %v1486 = vunpack.c.h.b16 %v1424
        %v1487 = vunpack.c.l.b16 %v1425
        %v1488 = vunpack.c.h.b16 %v1425
        %v1489 = vpack.c.b16 %v1487, %v1485
        %v1490 = vpack.c.b16 %v1488, %v1486
        %v1493 = vsel %vm1141, %v1490, 0
        %1495 = vmatprep.subr.bf16.mxu0 0
        %1496 = vmatpush1.bf16.msra.mxu0 %v1464
        %1497 = vmatprep.subr.bf16.mxu0 0
        %1498 = vmatpush1.bf16.msra.mxu0 %v1465
        %1499 = vmatprep.subr.bf16.mxu0 0
        %1500 = vmatpush1.bf16.msra.mxu0 %v1466
        %1501 = vmatprep.subr.bf16.mxu0 0
        %1502 = vmatpush1.bf16.msra.mxu0 %v1467
        %1503 = vmatprep.subr.bf16.mxu0 0
        %1504 = vmatpush1.bf16.msra.mxu0 %v1468
        %1505 = vmatprep.subr.bf16.mxu0 0
        %1506 = vmatpush1.bf16.msra.mxu0 %v1469
        %1507 = vmatprep.subr.bf16.mxu0 0
        %1508 = vmatpush1.bf16.msra.mxu0 %v1470
        %1509 = vmatprep.subr.bf16.mxu0 0
        %1510 = vmatpush1.bf16.msra.mxu0 %v1471
        %1511 = vmatprep.subr.bf16.mxu0 0
        %1512 = vmatpush1.bf16.msra.mxu0 %v1472
        %1513 = vmatprep.subr.bf16.mxu0 0
        %1514 = vmatpush1.bf16.msra.mxu0 0
        %1515 = vmatprep.subr.bf16.mxu0 0
        %1516 = vmatpush1.bf16.msra.mxu0 0
        %1517 = vmatprep.subr.bf16.mxu0 0
        %1518 = vmatpush1.bf16.msra.mxu0 0
        %1519 = vmatprep.subr.bf16.mxu0 0
        %1520 = vmatpush1.bf16.msra.mxu0 0
        %1521 = vmatprep.subr.bf16.mxu0 0
        %1522 = vmatpush1.bf16.msra.mxu0 0
        %1523 = vmatprep.subr.bf16.mxu0 0
        %1524 = vmatpush1.bf16.msra.mxu0 0
        %1525 = vmatprep.subr.bf16.mxu0 0
        %1526 = vmatpush1.bf16.msra.mxu0 0
        %1527 = vmatprep.mubr.bf16.mxu0 %v1493
        %1528 = vmatmul.mubr.bf16.gmra.mrb[0].mxu0 %v1489
        %v1529 = vpop.f32.mrb[0].mxu0
        %v1530 = vadd.f32 %v1476, %v1529
        %v1531 = vpop.f32.mrb[0].mxu0
        %v1532 = vpop.f32.mrb[0].mxu0
        %v1533 = vadd.f32 %v1481, %v1532
        %v1534 = vpop.f32.mrb[0].mxu0
        %1535 = vdwg.mxu0
        %v1536 = vmax.f32 %v1530, 0.0
        %v1537 = vmax.f32 %v1533, 0.0
        %v1538 = vmul.f32 %v1536, %v1192
        %v1539 = vmul.f32 %v1537, %v1192
        %1540 = vrot.lane.b32.xlu0 %v1538, 11
        %v1541 = vpop.permute.xlu0 %1540
        %1542 = vrot.lane.b32.xlu0 %v1539, 11
        %v1543 = vpop.permute.xlu0 %1542
        %1544 = vrot.lane.b32.xlu0 %v1538, 10
        %v1545 = vpop.permute.xlu0 %1544
        %1546 = vrot.lane.b32.xlu0 %v1539, 10
        %v1547 = vpop.permute.xlu0 %1546
        %1548 = vrot.lane.b32.xlu0 %v1538, 9
        %v1549 = vpop.permute.xlu0 %1548
        %1550 = vrot.lane.b32.xlu0 %v1539, 9
        %v1551 = vpop.permute.xlu0 %1550
        %1552 = vrot.lane.b32.xlu0 %v1538, 1
        %v1553 = vpop.permute.xlu0 %1552
        %1554 = vrot.lane.b32.xlu0 %v1539, 1
        %v1555 = vpop.permute.xlu0 %1554
        %1556 = vrot.lane.b32.xlu0 %v1538, 127
        %v1557 = vpop.permute.xlu0 %1556
        %1558 = vrot.lane.b32.xlu0 %v1539, 127
        %v1559 = vpop.permute.xlu0 %1558
        %1560 = vrot.lane.b32.xlu0 %v1538, 119
        %v1561 = vpop.permute.xlu0 %1560
        %1562 = vrot.lane.b32.xlu0 %v1539, 119
        %v1563 = vpop.permute.xlu0 %1562
        %1564 = vrot.lane.b32.xlu0 %v1538, 118
        %v1565 = vpop.permute.xlu0 %1564
        %1566 = vrot.lane.b32.xlu0 %v1539, 118
        %v1567 = vpop.permute.xlu0 %1566
        %1568 = vrot.lane.b32.xlu0 %v1538, 117
        %v1569 = vpop.permute.xlu0 %1568
        %1570 = vrot.lane.b32.xlu0 %v1539, 117
        %v1571 = vpop.permute.xlu0 %1570
        %v1572 = vpack.c.bf16 %v1543, %v1541
        %v1573 = vpack.c.bf16 %v1547, %v1545
        %v1574 = vpack.c.bf16 %v1551, %v1549
        %v1575 = vpack.c.bf16 %v1555, %v1553
        %v1576 = vpack.c.bf16 %v1539, %v1538
        %v1577 = vpack.c.bf16 %v1559, %v1557
        %v1578 = vpack.c.bf16 %v1563, %v1561
        %v1579 = vpack.c.bf16 %v1567, %v1565
        %v1580 = vpack.c.bf16 %v1571, %v1569
        %1582 = vset.pattern.permute.xlu0 0
        %1583 = vperm.xlu0 %1582, %v1430
        %v1584 = vpop.permute.xlu0 %1583
        %1587 = vset.pattern.permute.xlu0 0
        %1588 = vperm.xlu0 %1587, %v1431
        %v1589 = vpop.permute.xlu0 %1588
        %v1593 = vunpack.c.l.b16 %v1428
        %v1594 = vunpack.c.h.b16 %v1428
        %v1595 = vunpack.c.l.b16 %v1429
        %v1596 = vunpack.c.h.b16 %v1429
        %v1597 = vpack.c.b16 %v1595, %v1593
        %v1598 = vpack.c.b16 %v1596, %v1594
        %v1601 = vsel %vm1141, %v1598, 0
        %1603 = vmatprep.subr.bf16.mxu0 0
        %1604 = vmatpush1.bf16.msra.mxu0 %v1572
        %1605 = vmatprep.subr.bf16.mxu0 0
        %1606 = vmatpush1.bf16.msra.mxu0 %v1573
        %1607 = vmatprep.subr.bf16.mxu0 0
        %1608 = vmatpush1.bf16.msra.mxu0 %v1574
        %1609 = vmatprep.subr.bf16.mxu0 0
        %1610 = vmatpush1.bf16.msra.mxu0 %v1575
        %1611 = vmatprep.subr.bf16.mxu0 0
        %1612 = vmatpush1.bf16.msra.mxu0 %v1576
        %1613 = vmatprep.subr.bf16.mxu0 0
        %1614 = vmatpush1.bf16.msra.mxu0 %v1577
        %1615 = vmatprep.subr.bf16.mxu0 0
        %1616 = vmatpush1.bf16.msra.mxu0 %v1578
        %1617 = vmatprep.subr.bf16.mxu0 0
        %1618 = vmatpush1.bf16.msra.mxu0 %v1579
        %1619 = vmatprep.subr.bf16.mxu0 0
        %1620 = vmatpush1.bf16.msra.mxu0 %v1580
        %1621 = vmatprep.subr.bf16.mxu0 0
        %1622 = vmatpush1.bf16.msra.mxu0 0
        %1623 = vmatprep.subr.bf16.mxu0 0
        %1624 = vmatpush1.bf16.msra.mxu0 0
        %1625 = vmatprep.subr.bf16.mxu0 0
        %1626 = vmatpush1.bf16.msra.mxu0 0
        %1627 = vmatprep.subr.bf16.mxu0 0
        %1628 = vmatpush1.bf16.msra.mxu0 0
        %1629 = vmatprep.subr.bf16.mxu0 0
        %1630 = vmatpush1.bf16.msra.mxu0 0
        %1631 = vmatprep.subr.bf16.mxu0 0
        %1632 = vmatpush1.bf16.msra.mxu0 0
        %1633 = vmatprep.subr.bf16.mxu0 0
        %1634 = vmatpush1.bf16.msra.mxu0 0
        %1635 = vmatprep.mubr.bf16.mxu0 %v1601
        %1636 = vmatmul.mubr.bf16.gmra.mrb[0].mxu0 %v1597
        %v1637 = vpop.f32.mrb[0].mxu0
        %v1638 = vadd.f32 %v1584, %v1637
        %v1639 = vpop.f32.mrb[0].mxu0
        %v1640 = vpop.f32.mrb[0].mxu0
        %v1641 = vadd.f32 %v1589, %v1640
        %v1642 = vpop.f32.mrb[0].mxu0
        %1643 = vdwg.mxu0
        %v1644 = vadd.f32 %v1638, %v1420
        %v1645 = vadd.f32 %v1641, %v1421
        %v1646 = vmul.f32 %v1644, %v1192
        %v1647 = vmul.f32 %v1645, %v1192
        %1648 = vst [vmem:[%s551] sm:$0xff] %v1646
        %1649 = vst [vmem:[%s551 + $0x8] sm:$0xff] %v1647
        %s1650 = sand.u32 %s357, 1
        %s1651 = sand.u32 %s357, 1
        %s1652 = smul.addr %s1651, 16
        %s1653 = scalar_lea.vmem [#allocation2], %s1652
        %s1654 = sand.u32 %s383, 1
        %s1655 = sand.u32 %s383, 1
        %s1656 = smul.addr %s1655, 16
        %s1657 = scalar_lea.vmem [#allocation3], %s1656
        %s1658 = sand.u32 %s409, 1
        %s1659 = sand.u32 %s409, 1
        %s1660 = smul.addr %s1659, 16
        %s1661 = scalar_lea.vmem [#allocation4], %s1660
        // Predicated region
        $region81: #{stage_forward.1} parent=79 // pred_check
          %p1662 = pneg %p367
        $region82: #{stage_forward.1} parent=79 // pred_check_branch
          %1664 = sbr.rel (%p1662) target = $region84
        $region83: #{stage_forward.1} parent=79 // pred_region
          %s1665 = smul.addr %s29, 8
          %s1666 = scalar_lea.vmem %s15, %s1665
          // Predicated region
          $region85: #{stage_forward.1} parent=83 // pred_check
            _
          $region86: #{stage_forward.1} parent=83 // pred_check_branch
            %1668 = sbr.rel (0) target = $region88
          $region87: #{stage_forward.1} parent=83 // pred_region
            // Predicated region
            $region89: #{stage_forward.1} parent=87 // pred_check
              _
            $region90: #{stage_forward.1} parent=87 // pred_check_branch
              %1670 = sbr.rel (0) target = $region92
            $region91: #{stage_forward.1} parent=87 // pred_region
              // Predicated region
              $region104: #{stage_forward.1} parent=91 // pred_check
                _
              $region105: #{stage_forward.1} parent=91 // pred_check_branch
                %1687 = sbr.rel (0) target = $region107
              $region106: #{stage_forward.1} parent=91 // pred_region
                loop: start=0, step=1, limit=1
                $region108: #{stage_forward.1} parent=106 // loop_pre_header
                  _
                $region109: #{stage_forward.1} parent=106 // loop_header
                  %s1689 = sphi 0, %s1693
                  %p1690 = scmp.ge.s32.totalorder %s1689, 1
                  %s1694 = sphi %s1653, %s1653
                  %s1695 = sphi %s1666, %s1666
                $region110: #{stage_forward.1} parent=106 // loop_header_branch
                  %1692 = sbr.rel (%p1690) target = $region114
                $region111: #{stage_forward.1} parent=106 // loop_body
                  %v1696 = vld [vmem:[%s1694] sm:$0xff]
                  %1697 = vst [vmem:[%s1695] sm:$0xff] %v1696
                  %v1698 = vld [vmem:[%s1694 + $0x8] sm:$0xff]
                  %1699 = vst [vmem:[%s1695 + $0x10] sm:$0xff] %v1698
                $region112: #{stage_forward.1} parent=106 // loop_footer
                  %s1693 = sadd.s32 1, %s1689
                $region113: #{stage_forward.1} parent=106 // loop_footer_branch
                  %1688 = sbr.rel target = $region109
                $region114: #{stage_forward.1} parent=106 // loop_exit
                  _
              $region107: #{stage_forward.1} parent=91 // pred_fallthru
                _
              // Predicated region
              $region115: #{stage_forward.1} parent=91 // pred_check
                _
              $region116: #{stage_forward.1} parent=91 // pred_check_branch
                %1701 = sbr.rel target = $region118
              $region117: #{stage_forward.1} parent=91 // pred_region
                _
              $region118: #{stage_forward.1} parent=91 // pred_fallthru
                _
            $region92: #{stage_forward.1} parent=87 // pred_fallthru
              _
            // Predicated region
            $region93: #{stage_forward.1} parent=87 // pred_check
              _
            $region94: #{stage_forward.1} parent=87 // pred_check_branch
              %1672 = sbr.rel target = $region96
            $region95: #{stage_forward.1} parent=87 // pred_region
              loop: start=0, step=1, limit=1
              $region97: #{stage_forward.1} parent=95 // loop_pre_header
                _
              $region98: #{stage_forward.1} parent=95 // loop_header
                %s1675 = sphi 0, %s1679
                %p1676 = scmp.ge.s32.totalorder %s1675, 1
                %s1680 = sphi %s1653, %s1653
                %s1681 = sphi %s1666, %s1666
              $region99: #{stage_forward.1} parent=95 // loop_header_branch
                %1678 = sbr.rel (%p1676) target = $region103
              $region100: #{stage_forward.1} parent=95 // loop_body
                %v1682 = vld [vmem:[%s1680] sm:$0xff]
                %1683 = vst [vmem:[%s1681] sm:$0xff] %v1682
                %v1684 = vld [vmem:[%s1680 + $0x8] sm:$0xff]
                %1685 = vst [vmem:[%s1681 + $0x10] sm:$0xff] %v1684
              $region101: #{stage_forward.1} parent=95 // loop_footer
                %s1679 = sadd.s32 1, %s1675
              $region102: #{stage_forward.1} parent=95 // loop_footer_branch
                %1674 = sbr.rel target = $region98
              $region103: #{stage_forward.1} parent=95 // loop_exit
                _
            $region96: #{stage_forward.1} parent=87 // pred_fallthru
              _
          $region88: #{stage_forward.1} parent=83 // pred_fallthru
            _
          %1702 = vnop
        $region84: #{stage_forward.1} parent=79 // pred_fallthru
          _
        // Predicated region
        $region119: #{stage_forward.1} parent=79 // pred_check
          %p1703 = pneg %p393
        $region120: #{stage_forward.1} parent=79 // pred_check_branch
          %1705 = sbr.rel (%p1703) target = $region122
        $region121: #{stage_forward.1} parent=79 // pred_region
          %s1706 = smul.addr %s29, 8
          %s1707 = scalar_lea.vmem %s16, %s1706
          // Predicated region
          $region123: #{stage_forward.1} parent=121 // pred_check
            _
          $region124: #{stage_forward.1} parent=121 // pred_check_branch
            %1709 = sbr.rel (0) target = $region126
          $region125: #{stage_forward.1} parent=121 // pred_region
            // Predicated region
            $region127: #{stage_forward.1} parent=125 // pred_check
              _
            $region128: #{stage_forward.1} parent=125 // pred_check_branch
              %1711 = sbr.rel (0) target = $region130
            $region129: #{stage_forward.1} parent=125 // pred_region
              // Predicated region
              $region142: #{stage_forward.1} parent=129 // pred_check
                _
              $region143: #{stage_forward.1} parent=129 // pred_check_branch
                %1728 = sbr.rel (0) target = $region145
              $region144: #{stage_forward.1} parent=129 // pred_region
                loop: start=0, step=1, limit=1
                $region146: #{stage_forward.1} parent=144 // loop_pre_header
                  _
                $region147: #{stage_forward.1} parent=144 // loop_header
                  %s1730 = sphi 0, %s1734
                  %p1731 = scmp.ge.s32.totalorder %s1730, 1
                  %s1735 = sphi %s1657, %s1657
                  %s1736 = sphi %s1707, %s1707
                $region148: #{stage_forward.1} parent=144 // loop_header_branch
                  %1733 = sbr.rel (%p1731) target = $region152
                $region149: #{stage_forward.1} parent=144 // loop_body
                  %v1737 = vld [vmem:[%s1735] sm:$0xff]
                  %1738 = vst [vmem:[%s1736] sm:$0xff] %v1737
                  %v1739 = vld [vmem:[%s1735 + $0x8] sm:$0xff]
                  %1740 = vst [vmem:[%s1736 + $0x10] sm:$0xff] %v1739
                $region150: #{stage_forward.1} parent=144 // loop_footer
                  %s1734 = sadd.s32 1, %s1730
                $region151: #{stage_forward.1} parent=144 // loop_footer_branch
                  %1729 = sbr.rel target = $region147
                $region152: #{stage_forward.1} parent=144 // loop_exit
                  _
              $region145: #{stage_forward.1} parent=129 // pred_fallthru
                _
              // Predicated region
              $region153: #{stage_forward.1} parent=129 // pred_check
                _
              $region154: #{stage_forward.1} parent=129 // pred_check_branch
                %1742 = sbr.rel target = $region156
              $region155: #{stage_forward.1} parent=129 // pred_region
                _
              $region156: #{stage_forward.1} parent=129 // pred_fallthru
                _
            $region130: #{stage_forward.1} parent=125 // pred_fallthru
              _
            // Predicated region
            $region131: #{stage_forward.1} parent=125 // pred_check
              _
            $region132: #{stage_forward.1} parent=125 // pred_check_branch
              %1713 = sbr.rel target = $region134
            $region133: #{stage_forward.1} parent=125 // pred_region
              loop: start=0, step=1, limit=1
              $region135: #{stage_forward.1} parent=133 // loop_pre_header
                _
              $region136: #{stage_forward.1} parent=133 // loop_header
                %s1716 = sphi 0, %s1720
                %p1717 = scmp.ge.s32.totalorder %s1716, 1
                %s1721 = sphi %s1657, %s1657
                %s1722 = sphi %s1707, %s1707
              $region137: #{stage_forward.1} parent=133 // loop_header_branch
                %1719 = sbr.rel (%p1717) target = $region141
              $region138: #{stage_forward.1} parent=133 // loop_body
                %v1723 = vld [vmem:[%s1721] sm:$0xff]
                %1724 = vst [vmem:[%s1722] sm:$0xff] %v1723
                %v1725 = vld [vmem:[%s1721 + $0x8] sm:$0xff]
                %1726 = vst [vmem:[%s1722 + $0x10] sm:$0xff] %v1725
              $region139: #{stage_forward.1} parent=133 // loop_footer
                %s1720 = sadd.s32 1, %s1716
              $region140: #{stage_forward.1} parent=133 // loop_footer_branch
                %1715 = sbr.rel target = $region136
              $region141: #{stage_forward.1} parent=133 // loop_exit
                _
            $region134: #{stage_forward.1} parent=125 // pred_fallthru
              _
          $region126: #{stage_forward.1} parent=121 // pred_fallthru
            _
          %1743 = vnop
        $region122: #{stage_forward.1} parent=79 // pred_fallthru
          _
        // Predicated region
        $region157: #{stage_forward.1} parent=79 // pred_check
          %p1744 = pneg %p419
        $region158: #{stage_forward.1} parent=79 // pred_check_branch
          %1746 = sbr.rel (%p1744) target = $region160
        $region159: #{stage_forward.1} parent=79 // pred_region
          %s1747 = smul.addr %s29, 8
          %s1748 = scalar_lea.vmem %s17, %s1747
          // Predicated region
          $region161: #{stage_forward.1} parent=159 // pred_check
            _
          $region162: #{stage_forward.1} parent=159 // pred_check_branch
            %1750 = sbr.rel (0) target = $region164
          $region163: #{stage_forward.1} parent=159 // pred_region
            // Predicated region
            $region165: #{stage_forward.1} parent=163 // pred_check
              _
            $region166: #{stage_forward.1} parent=163 // pred_check_branch
              %1752 = sbr.rel (0) target = $region168
            $region167: #{stage_forward.1} parent=163 // pred_region
              // Predicated region
              $region180: #{stage_forward.1} parent=167 // pred_check
                _
              $region181: #{stage_forward.1} parent=167 // pred_check_branch
                %1769 = sbr.rel (0) target = $region183
              $region182: #{stage_forward.1} parent=167 // pred_region
                loop: start=0, step=1, limit=1
                $region184: #{stage_forward.1} parent=182 // loop_pre_header
                  _
                $region185: #{stage_forward.1} parent=182 // loop_header
                  %s1771 = sphi 0, %s1775
                  %p1772 = scmp.ge.s32.totalorder %s1771, 1
                  %s1776 = sphi %s1661, %s1661
                  %s1777 = sphi %s1748, %s1748
                $region186: #{stage_forward.1} parent=182 // loop_header_branch
                  %1774 = sbr.rel (%p1772) target = $region190
                $region187: #{stage_forward.1} parent=182 // loop_body
                  %v1778 = vld [vmem:[%s1776] sm:$0xff]
                  %1779 = vst [vmem:[%s1777] sm:$0xff] %v1778
                  %v1780 = vld [vmem:[%s1776 + $0x8] sm:$0xff]
                  %1781 = vst [vmem:[%s1777 + $0x10] sm:$0xff] %v1780
                $region188: #{stage_forward.1} parent=182 // loop_footer
                  %s1775 = sadd.s32 1, %s1771
                $region189: #{stage_forward.1} parent=182 // loop_footer_branch
                  %1770 = sbr.rel target = $region185
                $region190: #{stage_forward.1} parent=182 // loop_exit
                  _
              $region183: #{stage_forward.1} parent=167 // pred_fallthru
                _
              // Predicated region
              $region191: #{stage_forward.1} parent=167 // pred_check
                _
              $region192: #{stage_forward.1} parent=167 // pred_check_branch
                %1783 = sbr.rel target = $region194
              $region193: #{stage_forward.1} parent=167 // pred_region
                _
              $region194: #{stage_forward.1} parent=167 // pred_fallthru
                _
            $region168: #{stage_forward.1} parent=163 // pred_fallthru
              _
            // Predicated region
            $region169: #{stage_forward.1} parent=163 // pred_check
              _
            $region170: #{stage_forward.1} parent=163 // pred_check_branch
              %1754 = sbr.rel target = $region172
            $region171: #{stage_forward.1} parent=163 // pred_region
              loop: start=0, step=1, limit=1
              $region173: #{stage_forward.1} parent=171 // loop_pre_header
                _
              $region174: #{stage_forward.1} parent=171 // loop_header
                %s1757 = sphi 0, %s1761
                %p1758 = scmp.ge.s32.totalorder %s1757, 1
                %s1762 = sphi %s1661, %s1661
                %s1763 = sphi %s1748, %s1748
              $region175: #{stage_forward.1} parent=171 // loop_header_branch
                %1760 = sbr.rel (%p1758) target = $region179
              $region176: #{stage_forward.1} parent=171 // loop_body
                %v1764 = vld [vmem:[%s1762] sm:$0xff]
                %1765 = vst [vmem:[%s1763] sm:$0xff] %v1764
                %v1766 = vld [vmem:[%s1762 + $0x8] sm:$0xff]
                %1767 = vst [vmem:[%s1763 + $0x10] sm:$0xff] %v1766
              $region177: #{stage_forward.1} parent=171 // loop_footer
                %s1761 = sadd.s32 1, %s1757
              $region178: #{stage_forward.1} parent=171 // loop_footer_branch
                %1756 = sbr.rel target = $region174
              $region179: #{stage_forward.1} parent=171 // loop_exit
                _
            $region172: #{stage_forward.1} parent=163 // pred_fallthru
              _
          $region164: #{stage_forward.1} parent=159 // pred_fallthru
            _
          %1784 = vnop
        $region160: #{stage_forward.1} parent=79 // pred_fallthru
          _
      $region80: #{stage_forward.1} parent=5 // pred_fallthru
        _
      %p1785 = scmp.le.s32.totalorder 2, %s24
      // Predicated region
      $region195: #{stage_forward.1} parent=5 // pred_check
        %p1786 = pneg %p1785
      $region196: #{stage_forward.1} parent=5 // pred_check_branch
        %1788 = sbr.rel (%p1786) target = $region198
      $region197: #{stage_forward.1} parent=5 // pred_region
        %s1789 = ssub.s32 %s24, 2
        // Predicated region
        $region199: #{stage_forward.1} parent=197 // pred_check
          %p1790 = pneg %p373
        $region200: #{stage_forward.1} parent=197 // pred_check_branch
          %1792 = sbr.rel (%p1790) target = $region202
        $region201: #{stage_forward.1} parent=197 // pred_region
          %s1793 = sand.u32 %s358, 1
          %s1794 = sand.u32 %s358, 1
          %s1795 = smul.addr %s1794, 16
          %s1796 = scalar_lea.vmem [#allocation2], %s1795
        $region202: #{stage_forward.1} parent=197 // pred_fallthru
          _
        // Predicated region
        $region203: #{stage_forward.1} parent=197 // pred_check
          %p1797 = pneg %p399
        $region204: #{stage_forward.1} parent=197 // pred_check_branch
          %1799 = sbr.rel (%p1797) target = $region206
        $region205: #{stage_forward.1} parent=197 // pred_region
          %s1800 = sand.u32 %s384, 1
          %s1801 = sand.u32 %s384, 1
          %s1802 = smul.addr %s1801, 16
          %s1803 = scalar_lea.vmem [#allocation3], %s1802
        $region206: #{stage_forward.1} parent=197 // pred_fallthru
          _
        // Predicated region
        $region207: #{stage_forward.1} parent=197 // pred_check
          %p1804 = pneg %p425
        $region208: #{stage_forward.1} parent=197 // pred_check_branch
          %1806 = sbr.rel (%p1804) target = $region210
        $region209: #{stage_forward.1} parent=197 // pred_region
          %s1807 = sand.u32 %s410, 1
          %s1808 = sand.u32 %s410, 1
          %s1809 = smul.addr %s1808, 16
          %s1810 = scalar_lea.vmem [#allocation4], %s1809
        $region210: #{stage_forward.1} parent=197 // pred_fallthru
          _
      $region198: #{stage_forward.1} parent=5 // pred_fallthru
        _
    $region6: #{stage_forward.1} parent=1 // loop_footer
      %s28 = sadd.s32 1, %s24
    $region7: #{stage_forward.1} parent=1 // loop_footer_branch
      %23 = sbr.rel target = $region3
    $region8: #{stage_forward.1} parent=1 // loop_exit
      _

</llo_original>
